<compile_context>
chip_gen: v6e
topology: v6e:2x2x1
jax: 0.10.0
libtpu: 0.0.40
codegen_flags: <defaults>
</compile_context>

<pallas_src>
import math
import numpy as np
import jax
import jax.numpy as jnp
from jax.experimental import pallas as pl
from jax.experimental.pallas import tpu as pltpu

# ---- small model config (ModelArgs analogue) ----------------------------------
DIM = 128
N_HEADS = 4
N_KV_HEADS = 2
HEAD_DIM = DIM // N_HEADS          # 32
HALF = HEAD_DIM // 2               # 16
N_REP = N_HEADS // N_KV_HEADS      # 2
MULTIPLE_OF = 128
NORM_EPS = 1e-5
ROPE_THETA = 500000.0

Q_W = N_HEADS * HEAD_DIM           # 128: q columns
KV_W = N_KV_HEADS * HEAD_DIM       # 64 : k (or v) columns
QK_W = Q_W + KV_W                  # 192: rotary (q|k) region of the fused output
V_OFF = QK_W                       # 192: start of v columns
P_OFF = QK_W + KV_W                # 256: start of rotate-partner (q|k) columns
QKV_W = P_OFF + QK_W               # 448: fused projection width


def _ffn_hidden_dim(dim):
    hidden = 4 * dim
    hidden = int(2 * hidden / 3)
    hidden = MULTIPLE_OF * ((hidden + MULTIPLE_OF - 1) // MULTIPLE_OF)
    return hidden


HIDDEN = _ffn_hidden_dim(DIM)      # 384


# ---- Pallas kernel: one full TransformerBlock forward per batch element -------
def _block_kernel(x_ref, wqkv_ref, wo_ref, w13_ref, w2_ref,
                  anw_ref, fnw_ref, cos_ref, sin_ref, o_ref):
    f32 = jnp.float32
    bf16 = jnp.bfloat16
    x = x_ref[0]                                   # (S, D) f32
    S = x.shape[0]

    def rmsnorm(v, w):                             # w: (1, D) f32
        ms = jnp.mean(v * v, axis=-1, keepdims=True)
        return w * (v * jax.lax.rsqrt(ms + NORM_EPS))

    # ---------------- attention ----------------
    hn = rmsnorm(x, anw_ref[...]).astype(bf16)
    # One fused matmul: [ q | k | v | q_partner | k_partner ]  (wq pre-scaled).
    y = jnp.dot(hn, wqkv_ref[...], preferred_element_type=f32)   # (S, 448)

    # Lane-dense RoPE: partner columns (imag/real of each pair, pre-permuted in
    # the weights) come straight out of the matmul -> no rolls / shuffles.
    qk_rot = y[:, :QK_W] * cos_ref[...] + y[:, P_OFF:] * sin_ref[...]   # (S,192)
    qk_bf = qk_rot.astype(bf16)
    v_bf = y[:, V_OFF:P_OFF].astype(bf16)                               # (S, 64)

    # Causal mask built in-kernel (start_pos = 0): 0 on/below diag, -1e30 above.
    row = jax.lax.broadcasted_iota(jnp.int32, (S, S), 0)
    col = jax.lax.broadcasted_iota(jnp.int32, (S, S), 1)
    neg = jnp.where(col > row, -1e30, 0.0).astype(f32)

    # Per-head attention; every operand is a contiguous 32-lane slice (GQA: two
    # query heads share each kv head).  4-iteration loop, statically unrolled.
    o_heads = []
    for h in range(N_HEADS):
        g = h // N_REP
        qh = qk_bf[:, h * HEAD_DIM:(h + 1) * HEAD_DIM]                  # (S, 32)
        kh = qk_bf[:, Q_W + g * HEAD_DIM:Q_W + (g + 1) * HEAD_DIM]      # (S, 32)
        vh = v_bf[:, g * HEAD_DIM:(g + 1) * HEAD_DIM]                   # (S, 32)
        s = jax.lax.dot_general(qh, kh, (((1,), (1,)), ((), ())),
                                preferred_element_type=f32) + neg       # (S, S)
        s = s - jnp.max(s, axis=-1, keepdims=True)
        p = jnp.exp(s)                                                  # f32
        recip = 1.0 / jnp.sum(p, axis=-1, keepdims=True)
        p_n = (p * recip).astype(bf16)                                  # normalize p
        o_heads.append(jnp.dot(p_n, vh, preferred_element_type=f32))    # (S, 32)

    # Fused output projection: one lane-dense (S,128) @ (128,128) matmul.
    attn = jnp.concatenate(o_heads, axis=-1).astype(bf16)               # (S, 128)
    h_res = x + jnp.dot(attn, wo_ref[...], preferred_element_type=f32)

    # ---------------- SwiGLU feed-forward (w1|w3 fused) ----------------
    hn2 = rmsnorm(h_res, fnw_ref[...]).astype(bf16)
    y13 = jnp.dot(hn2, w13_ref[...], preferred_element_type=f32)        # (S, 768)
    g1 = y13[:, :HIDDEN]
    u = y13[:, HIDDEN:]
    act = (g1 * (1.0 / (1.0 + jnp.exp(-g1))) * u).astype(bf16)          # silu(g1)*u
    ffn = jnp.dot(act, w2_ref[...], preferred_element_type=f32)

    o_ref[0] = h_res + ffn


def transformer_block_pallas(x, prep_params, rope_tables):
    """Forward pass.  `prep_params` / `rope_tables` must come from
    prepare_params / make_kernel_rope_tables (one-time preprocessing)."""
    B, S, D = x.shape
    wqkv, wo, w13, w2, anw, fnw = prep_params
    cos_tab, sin_tab = rope_tables

    args = (x, wqkv, wo, w13, w2, anw, fnw, cos_tab, sin_tab)

    def full_spec(a):
        nd = a.ndim
        return pl.BlockSpec(a.shape, lambda b, _nd=nd: (0,) * _nd)

    in_specs = [pl.BlockSpec((1, S, D), lambda b: (b, 0, 0))]
    in_specs += [full_spec(a) for a in args[1:]]

    # grid=(B,) parallel: on v7x the two TensorCores each take one batch element;
    # on single-TC v5e/v6e the extra grid step at B=2 costs ~0.35us (negligible).
    return pl.pallas_call(
        _block_kernel,
        out_shape=jax.ShapeDtypeStruct((B, S, D), jnp.float32),
        grid=(B,),
        in_specs=in_specs,
        out_specs=pl.BlockSpec((1, S, D), lambda b: (b, 0, 0)),
        compiler_params=pltpu.CompilerParams(dimension_semantics=("parallel",)),
    )(*args)


# ---- one-time parameter / table preprocessing ----------------------------------
def prepare_params(params):
    """Fuse wq|wk|wv plus the pair-swapped RoPE partner columns of wq|wk into a
    single (DIM, 448) weight, fuse w1|w3, fold 1/sqrt(head_dim) into wq, cast
    matmul weights to bf16.  Called once, outside the forward path."""
    wq, wk, wv, wo, w1, w2, w3, anw, fnw = params
    bf16 = jnp.bfloat16
    scale = 1.0 / math.sqrt(HEAD_DIM)
    wq_s = wq * scale

    def pair_swap(w):
        # swap columns within each (real, imag) pair: 2j <-> 2j+1
        idx = np.arange(w.shape[1]) ^ 1
        return jnp.take(w, jnp.asarray(idx, jnp.int32), axis=1)

    wqkv = jnp.concatenate(
        [wq_s, wk, wv, pair_swap(wq_s), pair_swap(wk)], axis=1).astype(bf16)
    w13 = jnp.concatenate([w1, w3], axis=1).astype(bf16)
    return (wqkv, wo.astype(bf16), w13, w2.astype(bf16),
            anw.reshape(1, DIM).astype(jnp.float32),
            fnw.reshape(1, DIM).astype(jnp.float32))


def _base_rope(seq_len):
    freqs = 1.0 / (ROPE_THETA ** (np.arange(0, HEAD_DIM, 2)[:HALF].astype(np.float32)
                                  / HEAD_DIM))
    ang = np.outer(np.arange(seq_len, dtype=np.float32), freqs)   # (S, HALF)
    return np.cos(ang), np.sin(ang)


def make_rope_tables(seq_len):
    """Base (S, HALF) cos/sin for the pure-JAX reference."""
    cos, sin = _base_rope(seq_len)
    return jnp.asarray(cos, jnp.float32), jnp.asarray(sin, jnp.float32)


def make_kernel_rope_tables(seq_len):
    """Lane-dense (S, 192) cos / signed-sin tables for the interleaved layout:
    even lane (real slot) gets -sin, odd lane (imag slot) gets +sin."""
    cos, sin = _base_rope(seq_len)
    cos_head = np.repeat(cos, 2, axis=1)                       # (S, 32)
    sin_head = np.repeat(sin, 2, axis=1)
    sign = np.tile(np.array([-1.0, 1.0], np.float32), HALF)    # (32,)
    sin_head = sin_head * sign[None, :]
    n_blocks = N_HEADS + N_KV_HEADS                            # 6 heads' worth = 192
    cos_tab = np.tile(cos_head, (1, n_blocks))
    sin_tab = np.tile(sin_head, (1, n_blocks))
    return jnp.asarray(cos_tab, jnp.float32), jnp.asarray(sin_tab, jnp.float32)


# ---- pure-JAX reference (mirrors the PyTorch module exactly, f32) --------------
def _ref_rope(t, cos, sin):
    shp = t.shape
    t2 = t.reshape(*shp[:-1], HALF, 2)
    tr, ti = t2[..., 0], t2[..., 1]
    c = cos[None, :, None, :]
    s = sin[None, :, None, :]
    return jnp.stack([tr * c - ti * s, tr * s + ti * c], axis=-1).reshape(shp)


def transformer_block_ref(x, params, cos, sin, mask):
    wq, wk, wv, wo, w1, w2, w3, anw, fnw = params
    B, S, D = x.shape

    def rms(v, w):
        return w * (v * jax.lax.rsqrt(jnp.mean(v * v, -1, keepdims=True) + NORM_EPS))

    hn = rms(x, anw)
    xq = (hn @ wq).reshape(B, S, N_HEADS, HEAD_DIM)
    xk = (hn @ wk).reshape(B, S, N_KV_HEADS, HEAD_DIM)
    xv = (hn @ wv).reshape(B, S, N_KV_HEADS, HEAD_DIM)
    xq = _ref_rope(xq, cos, sin)
    xk = _ref_rope(xk, cos, sin)
    keys = jnp.repeat(xk, N_REP, axis=2)
    values = jnp.repeat(xv, N_REP, axis=2)
    q = xq.transpose(0, 2, 1, 3)
    k = keys.transpose(0, 2, 1, 3)
    v = values.transpose(0, 2, 1, 3)
    scores = jnp.einsum('bhsd,bhtd->bhst', q, k) / math.sqrt(HEAD_DIM) + mask
    p = jax.nn.softmax(scores, axis=-1)
    o = jnp.einsum('bhst,bhtd->bhsd', p, v)
    o = o.transpose(0, 2, 1, 3).reshape(B, S, N_HEADS * HEAD_DIM)
    h = x + o @ wo
    hn2 = rms(h, fnw)
    ffn = (jax.nn.silu(hn2 @ w1) * (hn2 @ w3)) @ w2
    return h + ffn


# ---- setup helpers -------------------------------------------------------------
def init_params(key):
    ks = jax.random.split(key, 7)
    sc = 0.05
    wq = jax.random.normal(ks[0], (DIM, N_HEADS * HEAD_DIM), jnp.float32) * sc
    wk = jax.random.normal(ks[1], (DIM, N_KV_HEADS * HEAD_DIM), jnp.float32) * sc
    wv = jax.random.normal(ks[2], (DIM, N_KV_HEADS * HEAD_DIM), jnp.float32) * sc
    wo = jax.random.normal(ks[3], (N_HEADS * HEAD_DIM, DIM), jnp.float32) * sc
    w1 = jax.random.normal(ks[4], (DIM, HIDDEN), jnp.float32) * sc
    w2 = jax.random.normal(ks[5], (HIDDEN, DIM), jnp.float32) * sc
    w3 = jax.random.normal(ks[6], (DIM, HIDDEN), jnp.float32) * sc
    anw = jnp.ones((DIM,), jnp.float32)   # RMSNorm weights init to ones
    fnw = jnp.ones((DIM,), jnp.float32)
    return (wq, wk, wv, wo, w1, w2, w3, anw, fnw)


if __name__ == "__main__":
    B, S = 2, 8
    key = jax.random.PRNGKey(0)
    kx, kp = jax.random.split(key)
    x = jax.random.normal(kx, (B, S, DIM), jnp.float32)
    raw_params = init_params(kp)

    # One-time preprocessing (kept out of the per-call path; jit-safe forward).
    prep_params = prepare_params(raw_params)
    rope_tables = make_kernel_rope_tables(S)

    fwd = jax.jit(transformer_block_pallas)
    out = jax.block_until_ready(fwd(x, prep_params, rope_tables))

    # Reference (exactly mirrors the PyTorch module; start_pos = 0 causal mask).
    cos, sin = make_rope_tables(S)
    mask = jnp.where(np.triu(np.ones((S, S), bool), k=1), -1e30, 0.0).astype(jnp.float32)
    ref = jax.block_until_ready(transformer_block_ref(x, raw_params, cos, sin, mask))

    # bf16 MXU operands (f32 accumulation) -> tolerance sized for bf16 rounding,
    # still far below the O(0.1-1) error a real layout/sign bug would produce.
    np.testing.assert_allclose(np.asarray(out), np.asarray(ref), rtol=2e-2, atol=2e-2)
    print("KERNEL_OK")
</pallas_src>

<mosaic_0001>
module attributes {stable_mosaic.version = 11 : i64} {
  func.func @_block_kernel(%arg0: i32, %arg1: memref<1x8x128xf32, #tpu.memory_space<vmem>>, %arg2: memref<128x448xbf16, #tpu.memory_space<vmem>>, %arg3: memref<128x128xbf16, #tpu.memory_space<vmem>>, %arg4: memref<128x768xbf16, #tpu.memory_space<vmem>>, %arg5: memref<384x128xbf16, #tpu.memory_space<vmem>>, %arg6: memref<1x128xf32, #tpu.memory_space<vmem>>, %arg7: memref<1x128xf32, #tpu.memory_space<vmem>>, %arg8: memref<8x192xf32, #tpu.memory_space<vmem>>, %arg9: memref<8x192xf32, #tpu.memory_space<vmem>>, %arg10: memref<1x8x128xf32, #tpu.memory_space<vmem>>) attributes {dimension_semantics = [#tpu.dimension_semantics<parallel>], iteration_bounds = array<i64: 2>, scalar_prefetch = 0 : i64, scratch_operands = 0 : i64, tpu.core_type = #tpu.core_type<tc>, window_params = [{transform_indices = @transform_0, window_bounds = array<i64: 1, 8, 128>}, {pipeline_mode = #tpu.pipeline_mode<synchronous>, transform_indices = @transform_1, window_bounds = array<i64: 128, 448>}, {pipeline_mode = #tpu.pipeline_mode<synchronous>, transform_indices = @transform_2, window_bounds = array<i64: 128, 128>}, {pipeline_mode = #tpu.pipeline_mode<synchronous>, transform_indices = @transform_3, window_bounds = array<i64: 128, 768>}, {pipeline_mode = #tpu.pipeline_mode<synchronous>, transform_indices = @transform_4, window_bounds = array<i64: 384, 128>}, {pipeline_mode = #tpu.pipeline_mode<synchronous>, transform_indices = @transform_5, window_bounds = array<i64: 1, 128>}, {pipeline_mode = #tpu.pipeline_mode<synchronous>, transform_indices = @transform_6, window_bounds = array<i64: 1, 128>}, {pipeline_mode = #tpu.pipeline_mode<synchronous>, transform_indices = @transform_7, window_bounds = array<i64: 8, 192>}, {pipeline_mode = #tpu.pipeline_mode<synchronous>, transform_indices = @transform_8, window_bounds = array<i64: 8, 192>}, {transform_indices = @transform_9, window_bounds = array<i64: 1, 8, 128>}]} {
    %c0 = arith.constant 0 : index
    %c0_0 = arith.constant 0 : index
    %c0_1 = arith.constant 0 : index
    %0 = vector.load %arg1[%c0, %c0_0, %c0_1] : memref<1x8x128xf32, #tpu.memory_space<vmem>>, vector<1x8x128xf32>
    %1 = vector.shape_cast %0 : vector<1x8x128xf32> to vector<8x128xf32>
    %c0_2 = arith.constant 0 : index
    %c0_3 = arith.constant 0 : index
    %2 = vector.load %arg6[%c0_2, %c0_3] : memref<1x128xf32, #tpu.memory_space<vmem>>, vector<1x128xf32>
    %3 = arith.mulf %1, %1 : vector<8x128xf32>
    %cst = arith.constant dense<0.000000e+00> : vector<8xf32>
    %4 = vector.multi_reduction <add>, %3, %cst [1] : vector<8x128xf32> to vector<8xf32>
    %5 = vector.shape_cast %4 : vector<8xf32> to vector<8x1xf32>
    %cst_4 = arith.constant 1.280000e+02 : f32
    %6 = vector.broadcast %cst_4 : f32 to vector<8x1xf32>
    %7 = arith.divf %5, %6 : vector<8x1xf32>
    %cst_5 = arith.constant 9.99999974E-6 : f32
    %8 = vector.broadcast %cst_5 : f32 to vector<8x1xf32>
    %9 = arith.addf %7, %8 : vector<8x1xf32>
    %10 = math.rsqrt %9 : vector<8x1xf32>
    %11 = vector.broadcast %10 : vector<8x1xf32> to vector<8x128xf32>
    %12 = arith.mulf %1, %11 : vector<8x128xf32>
    %13 = vector.broadcast %2 : vector<1x128xf32> to vector<8x128xf32>
    %14 = arith.mulf %13, %12 : vector<8x128xf32>
    %15 = arith.truncf %14 : vector<8x128xf32> to vector<8x128xbf16>
    %c0_6 = arith.constant 0 : index
    %c0_7 = arith.constant 0 : index
    %16 = vector.load %arg2[%c0_6, %c0_7] : memref<128x448xbf16, #tpu.memory_space<vmem>>, vector<128x448xbf16>
    %cst_8 = arith.constant dense<0.000000e+00> : vector<8x448xf32>
    %17 = tpu.matmul %15, %16, %cst_8 {dimension_numbers = #tpu.dot_dimension_numbers<[1], [0], [0], [1], [0, 0, 1, 1], [], []>} : vector<8x128xbf16>, vector<128x448xbf16>, vector<8x448xf32> -> vector<8x448xf32>
    %18 = vector.extract_strided_slice %17 {offsets = [0, 0], sizes = [8, 192], strides = [1, 1]} : vector<8x448xf32> to vector<8x192xf32>
    %c0_9 = arith.constant 0 : index
    %c0_10 = arith.constant 0 : index
    %19 = vector.load %arg8[%c0_9, %c0_10] : memref<8x192xf32, #tpu.memory_space<vmem>>, vector<8x192xf32>
    %20 = arith.mulf %18, %19 : vector<8x192xf32>
    %21 = vector.extract_strided_slice %17 {offsets = [0, 256], sizes = [8, 192], strides = [1, 1]} : vector<8x448xf32> to vector<8x192xf32>
    %c0_11 = arith.constant 0 : index
    %c0_12 = arith.constant 0 : index
    %22 = vector.load %arg9[%c0_11, %c0_12] : memref<8x192xf32, #tpu.memory_space<vmem>>, vector<8x192xf32>
    %23 = arith.mulf %21, %22 : vector<8x192xf32>
    %24 = arith.addf %20, %23 : vector<8x192xf32>
    %25 = arith.truncf %24 : vector<8x192xf32> to vector<8x192xbf16>
    %26 = vector.extract_strided_slice %17 {offsets = [0, 192], sizes = [8, 64], strides = [1, 1]} : vector<8x448xf32> to vector<8x64xf32>
    %27 = arith.truncf %26 : vector<8x64xf32> to vector<8x64xbf16>
    %28 = tpu.iota {dimensions = array<i32: 0>} : vector<8x8xi32>
    %29 = tpu.iota {dimensions = array<i32: 1>} : vector<8x8xi32>
    %30 = arith.cmpi sgt, %29, %28 : vector<8x8xi32>
    %cst_13 = arith.constant -1.000000e+30 : f32
    %cst_14 = arith.constant 0.000000e+00 : f32
    %31 = vector.broadcast %cst_13 : f32 to vector<8x8xf32>
    %32 = vector.broadcast %cst_14 : f32 to vector<8x8xf32>
    %33 = arith.select %30, %31, %32 : vector<8x8xi1>, vector<8x8xf32>
    %34 = vector.extract_strided_slice %25 {offsets = [0, 0], sizes = [8, 32], strides = [1, 1]} : vector<8x192xbf16> to vector<8x32xbf16>
    %35 = vector.extract_strided_slice %25 {offsets = [0, 128], sizes = [8, 32], strides = [1, 1]} : vector<8x192xbf16> to vector<8x32xbf16>
    %36 = vector.extract_strided_slice %27 {offsets = [0, 0], sizes = [8, 32], strides = [1, 1]} : vector<8x64xbf16> to vector<8x32xbf16>
    %cst_15 = arith.constant dense<0.000000e+00> : vector<8x8xf32>
    %37 = tpu.matmul %34, %35, %cst_15 {dimension_numbers = #tpu.dot_dimension_numbers<[1], [1], [0], [0], [0, 0, 1, 0], [], []>} : vector<8x32xbf16>, vector<8x32xbf16>, vector<8x8xf32> -> vector<8x8xf32>
    %38 = arith.addf %37, %33 : vector<8x8xf32>
    %cst_16 = arith.constant dense<0xFF800000> : vector<8xf32>
    %39 = vector.multi_reduction <maximumf>, %38, %cst_16 [1] : vector<8x8xf32> to vector<8xf32>
    %40 = vector.shape_cast %39 : vector<8xf32> to vector<8x1xf32>
    %41 = vector.broadcast %40 : vector<8x1xf32> to vector<8x8xf32>
    %42 = arith.subf %38, %41 : vector<8x8xf32>
    %43 = math.exp %42 : vector<8x8xf32>
    %cst_17 = arith.constant dense<0.000000e+00> : vector<8xf32>
    %44 = vector.multi_reduction <add>, %43, %cst_17 [1] : vector<8x8xf32> to vector<8xf32>
    %45 = vector.shape_cast %44 : vector<8xf32> to vector<8x1xf32>
    %cst_18 = arith.constant 1.000000e+00 : f32
    %46 = vector.broadcast %cst_18 : f32 to vector<8x1xf32>
    %47 = arith.divf %46, %45 : vector<8x1xf32>
    %48 = vector.broadcast %47 : vector<8x1xf32> to vector<8x8xf32>
    %49 = arith.mulf %43, %48 : vector<8x8xf32>
    %50 = arith.truncf %49 : vector<8x8xf32> to vector<8x8xbf16>
    %cst_19 = arith.constant dense<0.000000e+00> : vector<8x32xf32>
    %51 = tpu.matmul %50, %36, %cst_19 {dimension_numbers = #tpu.dot_dimension_numbers<[1], [0], [0], [1], [0, 0, 1, 1], [], []>} : vector<8x8xbf16>, vector<8x32xbf16>, vector<8x32xf32> -> vector<8x32xf32>
    %52 = vector.extract_strided_slice %25 {offsets = [0, 32], sizes = [8, 32], strides = [1, 1]} : vector<8x192xbf16> to vector<8x32xbf16>
    %53 = vector.extract_strided_slice %25 {offsets = [0, 128], sizes = [8, 32], strides = [1, 1]} : vector<8x192xbf16> to vector<8x32xbf16>
    %54 = vector.extract_strided_slice %27 {offsets = [0, 0], sizes = [8, 32], strides = [1, 1]} : vector<8x64xbf16> to vector<8x32xbf16>
    %cst_20 = arith.constant dense<0.000000e+00> : vector<8x8xf32>
    %55 = tpu.matmul %52, %53, %cst_20 {dimension_numbers = #tpu.dot_dimension_numbers<[1], [1], [0], [0], [0, 0, 1, 0], [], []>} : vector<8x32xbf16>, vector<8x32xbf16>, vector<8x8xf32> -> vector<8x8xf32>
    %56 = arith.addf %55, %33 : vector<8x8xf32>
    %cst_21 = arith.constant dense<0xFF800000> : vector<8xf32>
    %57 = vector.multi_reduction <maximumf>, %56, %cst_21 [1] : vector<8x8xf32> to vector<8xf32>
    %58 = vector.shape_cast %57 : vector<8xf32> to vector<8x1xf32>
    %59 = vector.broadcast %58 : vector<8x1xf32> to vector<8x8xf32>
    %60 = arith.subf %56, %59 : vector<8x8xf32>
    %61 = math.exp %60 : vector<8x8xf32>
    %cst_22 = arith.constant dense<0.000000e+00> : vector<8xf32>
    %62 = vector.multi_reduction <add>, %61, %cst_22 [1] : vector<8x8xf32> to vector<8xf32>
    %63 = vector.shape_cast %62 : vector<8xf32> to vector<8x1xf32>
    %cst_23 = arith.constant 1.000000e+00 : f32
    %64 = vector.broadcast %cst_23 : f32 to vector<8x1xf32>
    %65 = arith.divf %64, %63 : vector<8x1xf32>
    %66 = vector.broadcast %65 : vector<8x1xf32> to vector<8x8xf32>
    %67 = arith.mulf %61, %66 : vector<8x8xf32>
    %68 = arith.truncf %67 : vector<8x8xf32> to vector<8x8xbf16>
    %cst_24 = arith.constant dense<0.000000e+00> : vector<8x32xf32>
    %69 = tpu.matmul %68, %54, %cst_24 {dimension_numbers = #tpu.dot_dimension_numbers<[1], [0], [0], [1], [0, 0, 1, 1], [], []>} : vector<8x8xbf16>, vector<8x32xbf16>, vector<8x32xf32> -> vector<8x32xf32>
    %70 = vector.extract_strided_slice %25 {offsets = [0, 64], sizes = [8, 32], strides = [1, 1]} : vector<8x192xbf16> to vector<8x32xbf16>
    %71 = vector.extract_strided_slice %25 {offsets = [0, 160], sizes = [8, 32], strides = [1, 1]} : vector<8x192xbf16> to vector<8x32xbf16>
    %72 = vector.extract_strided_slice %27 {offsets = [0, 32], sizes = [8, 32], strides = [1, 1]} : vector<8x64xbf16> to vector<8x32xbf16>
    %cst_25 = arith.constant dense<0.000000e+00> : vector<8x8xf32>
    %73 = tpu.matmul %70, %71, %cst_25 {dimension_numbers = #tpu.dot_dimension_numbers<[1], [1], [0], [0], [0, 0, 1, 0], [], []>} : vector<8x32xbf16>, vector<8x32xbf16>, vector<8x8xf32> -> vector<8x8xf32>
    %74 = arith.addf %73, %33 : vector<8x8xf32>
    %cst_26 = arith.constant dense<0xFF800000> : vector<8xf32>
    %75 = vector.multi_reduction <maximumf>, %74, %cst_26 [1] : vector<8x8xf32> to vector<8xf32>
    %76 = vector.shape_cast %75 : vector<8xf32> to vector<8x1xf32>
    %77 = vector.broadcast %76 : vector<8x1xf32> to vector<8x8xf32>
    %78 = arith.subf %74, %77 : vector<8x8xf32>
    %79 = math.exp %78 : vector<8x8xf32>
    %cst_27 = arith.constant dense<0.000000e+00> : vector<8xf32>
    %80 = vector.multi_reduction <add>, %79, %cst_27 [1] : vector<8x8xf32> to vector<8xf32>
    %81 = vector.shape_cast %80 : vector<8xf32> to vector<8x1xf32>
    %cst_28 = arith.constant 1.000000e+00 : f32
    %82 = vector.broadcast %cst_28 : f32 to vector<8x1xf32>
    %83 = arith.divf %82, %81 : vector<8x1xf32>
    %84 = vector.broadcast %83 : vector<8x1xf32> to vector<8x8xf32>
    %85 = arith.mulf %79, %84 : vector<8x8xf32>
    %86 = arith.truncf %85 : vector<8x8xf32> to vector<8x8xbf16>
    %cst_29 = arith.constant dense<0.000000e+00> : vector<8x32xf32>
    %87 = tpu.matmul %86, %72, %cst_29 {dimension_numbers = #tpu.dot_dimension_numbers<[1], [0], [0], [1], [0, 0, 1, 1], [], []>} : vector<8x8xbf16>, vector<8x32xbf16>, vector<8x32xf32> -> vector<8x32xf32>
    %88 = vector.extract_strided_slice %25 {offsets = [0, 96], sizes = [8, 32], strides = [1, 1]} : vector<8x192xbf16> to vector<8x32xbf16>
    %89 = vector.extract_strided_slice %25 {offsets = [0, 160], sizes = [8, 32], strides = [1, 1]} : vector<8x192xbf16> to vector<8x32xbf16>
    %90 = vector.extract_strided_slice %27 {offsets = [0, 32], sizes = [8, 32], strides = [1, 1]} : vector<8x64xbf16> to vector<8x32xbf16>
    %cst_30 = arith.constant dense<0.000000e+00> : vector<8x8xf32>
    %91 = tpu.matmul %88, %89, %cst_30 {dimension_numbers = #tpu.dot_dimension_numbers<[1], [1], [0], [0], [0, 0, 1, 0], [], []>} : vector<8x32xbf16>, vector<8x32xbf16>, vector<8x8xf32> -> vector<8x8xf32>
    %92 = arith.addf %91, %33 : vector<8x8xf32>
    %cst_31 = arith.constant dense<0xFF800000> : vector<8xf32>
    %93 = vector.multi_reduction <maximumf>, %92, %cst_31 [1] : vector<8x8xf32> to vector<8xf32>
    %94 = vector.shape_cast %93 : vector<8xf32> to vector<8x1xf32>
    %95 = vector.broadcast %94 : vector<8x1xf32> to vector<8x8xf32>
    %96 = arith.subf %92, %95 : vector<8x8xf32>
    %97 = math.exp %96 : vector<8x8xf32>
    %cst_32 = arith.constant dense<0.000000e+00> : vector<8xf32>
    %98 = vector.multi_reduction <add>, %97, %cst_32 [1] : vector<8x8xf32> to vector<8xf32>
    %99 = vector.shape_cast %98 : vector<8xf32> to vector<8x1xf32>
    %cst_33 = arith.constant 1.000000e+00 : f32
    %100 = vector.broadcast %cst_33 : f32 to vector<8x1xf32>
    %101 = arith.divf %100, %99 : vector<8x1xf32>
    %102 = vector.broadcast %101 : vector<8x1xf32> to vector<8x8xf32>
    %103 = arith.mulf %97, %102 : vector<8x8xf32>
    %104 = arith.truncf %103 : vector<8x8xf32> to vector<8x8xbf16>
    %cst_34 = arith.constant dense<0.000000e+00> : vector<8x32xf32>
    %105 = tpu.matmul %104, %90, %cst_34 {dimension_numbers = #tpu.dot_dimension_numbers<[1], [0], [0], [1], [0, 0, 1, 1], [], []>} : vector<8x8xbf16>, vector<8x32xbf16>, vector<8x32xf32> -> vector<8x32xf32>
    %106 = tpu.concatenate %51, %69, %87, %105 in 1 : vector<8x32xf32>, vector<8x32xf32>, vector<8x32xf32>, vector<8x32xf32> -> vector<8x128xf32>
    %107 = arith.truncf %106 : vector<8x128xf32> to vector<8x128xbf16>
    %c0_35 = arith.constant 0 : index
    %c0_36 = arith.constant 0 : index
    %108 = vector.load %arg3[%c0_35, %c0_36] : memref<128x128xbf16, #tpu.memory_space<vmem>>, vector<128x128xbf16>
    %cst_37 = arith.constant dense<0.000000e+00> : vector<8x128xf32>
    %109 = tpu.matmul %107, %108, %cst_37 {dimension_numbers = #tpu.dot_dimension_numbers<[1], [0], [0], [1], [0, 0, 1, 1], [], []>} : vector<8x128xbf16>, vector<128x128xbf16>, vector<8x128xf32> -> vector<8x128xf32>
    %110 = arith.addf %1, %109 : vector<8x128xf32>
    %c0_38 = arith.constant 0 : index
    %c0_39 = arith.constant 0 : index
    %111 = vector.load %arg7[%c0_38, %c0_39] : memref<1x128xf32, #tpu.memory_space<vmem>>, vector<1x128xf32>
    %112 = arith.mulf %110, %110 : vector<8x128xf32>
    %cst_40 = arith.constant dense<0.000000e+00> : vector<8xf32>
    %113 = vector.multi_reduction <add>, %112, %cst_40 [1] : vector<8x128xf32> to vector<8xf32>
    %114 = vector.shape_cast %113 : vector<8xf32> to vector<8x1xf32>
    %cst_41 = arith.constant 1.280000e+02 : f32
    %115 = vector.broadcast %cst_41 : f32 to vector<8x1xf32>
    %116 = arith.divf %114, %115 : vector<8x1xf32>
    %cst_42 = arith.constant 9.99999974E-6 : f32
    %117 = vector.broadcast %cst_42 : f32 to vector<8x1xf32>
    %118 = arith.addf %116, %117 : vector<8x1xf32>
    %119 = math.rsqrt %118 : vector<8x1xf32>
    %120 = vector.broadcast %119 : vector<8x1xf32> to vector<8x128xf32>
    %121 = arith.mulf %110, %120 : vector<8x128xf32>
    %122 = vector.broadcast %111 : vector<1x128xf32> to vector<8x128xf32>
    %123 = arith.mulf %122, %121 : vector<8x128xf32>
    %124 = arith.truncf %123 : vector<8x128xf32> to vector<8x128xbf16>
    %c0_43 = arith.constant 0 : index
    %c0_44 = arith.constant 0 : index
    %125 = vector.load %arg4[%c0_43, %c0_44] : memref<128x768xbf16, #tpu.memory_space<vmem>>, vector<128x768xbf16>
    %cst_45 = arith.constant dense<0.000000e+00> : vector<8x768xf32>
    %126 = tpu.matmul %124, %125, %cst_45 {dimension_numbers = #tpu.dot_dimension_numbers<[1], [0], [0], [1], [0, 0, 1, 1], [], []>} : vector<8x128xbf16>, vector<128x768xbf16>, vector<8x768xf32> -> vector<8x768xf32>
    %127 = vector.extract_strided_slice %126 {offsets = [0, 0], sizes = [8, 384], strides = [1, 1]} : vector<8x768xf32> to vector<8x384xf32>
    %128 = vector.extract_strided_slice %126 {offsets = [0, 384], sizes = [8, 384], strides = [1, 1]} : vector<8x768xf32> to vector<8x384xf32>
    %cst_46 = arith.constant 0.000000e+00 : f32
    %129 = vector.broadcast %cst_46 : f32 to vector<8x384xf32>
    %130 = arith.subf %129, %127 : vector<8x384xf32>
    %131 = math.exp %130 : vector<8x384xf32>
    %cst_47 = arith.constant 1.000000e+00 : f32
    %132 = vector.broadcast %cst_47 : f32 to vector<8x384xf32>
    %133 = arith.addf %132, %131 : vector<8x384xf32>
    %cst_48 = arith.constant 1.000000e+00 : f32
    %134 = vector.broadcast %cst_48 : f32 to vector<8x384xf32>
    %135 = arith.divf %134, %133 : vector<8x384xf32>
    %136 = arith.mulf %127, %135 : vector<8x384xf32>
    %137 = arith.mulf %136, %128 : vector<8x384xf32>
    %138 = arith.truncf %137 : vector<8x384xf32> to vector<8x384xbf16>
    %c0_49 = arith.constant 0 : index
    %c0_50 = arith.constant 0 : index
    %139 = vector.load %arg5[%c0_49, %c0_50] : memref<384x128xbf16, #tpu.memory_space<vmem>>, vector<384x128xbf16>
    %cst_51 = arith.constant dense<0.000000e+00> : vector<8x128xf32>
    %140 = tpu.matmul %138, %139, %cst_51 {dimension_numbers = #tpu.dot_dimension_numbers<[1], [0], [0], [1], [0, 0, 1, 1], [], []>} : vector<8x384xbf16>, vector<384x128xbf16>, vector<8x128xf32> -> vector<8x128xf32>
    %141 = arith.addf %110, %140 : vector<8x128xf32>
    %c0_52 = arith.constant 0 : index
    %c0_53 = arith.constant 0 : index
    %c0_54 = arith.constant 0 : index
    %142 = vector.load %arg10[%c0_52, %c0_53, %c0_54] : memref<1x8x128xf32, #tpu.memory_space<vmem>>, vector<1x8x128xf32>
    %143 = vector.shape_cast %142 : vector<1x8x128xf32> to vector<8x128xf32>
    %144 = vector.shape_cast %141 : vector<8x128xf32> to vector<1x8x128xf32>
    tpu.vector_store %arg10[%c0_52, %c0_53, %c0_54], %144 {strides = array<i32>} : memref<1x8x128xf32, #tpu.memory_space<vmem>>, vector<1x8x128xf32>,
    return
  }
  func.func @transform_0(%arg0: i32) -> (i32, i32, i32) {
    %c0_i32 = arith.constant 0 : i32
    %c0_i32_0 = arith.constant 0 : i32
    %c0_i32_1 = arith.constant 0 : i32
    return %arg0, %c0_i32, %c0_i32_0 : i32, i32, i32
  }
  func.func @transform_1(%arg0: i32) -> (i32, i32) {
    %c0_i32 = arith.constant 0 : i32
    %c0_i32_0 = arith.constant 0 : i32
    %c0_i32_1 = arith.constant 0 : i32
    return %c0_i32, %c0_i32_0 : i32, i32
  }
  func.func @transform_2(%arg0: i32) -> (i32, i32) {
    %c0_i32 = arith.constant 0 : i32
    %c0_i32_0 = arith.constant 0 : i32
    %c0_i32_1 = arith.constant 0 : i32
    return %c0_i32, %c0_i32_0 : i32, i32
  }
  func.func @transform_3(%arg0: i32) -> (i32, i32) {
    %c0_i32 = arith.constant 0 : i32
    %c0_i32_0 = arith.constant 0 : i32
    %c0_i32_1 = arith.constant 0 : i32
    return %c0_i32, %c0_i32_0 : i32, i32
  }
  func.func @transform_4(%arg0: i32) -> (i32, i32) {
    %c0_i32 = arith.constant 0 : i32
    %c0_i32_0 = arith.constant 0 : i32
    %c0_i32_1 = arith.constant 0 : i32
    return %c0_i32, %c0_i32_0 : i32, i32
  }
  func.func @transform_5(%arg0: i32) -> (i32, i32) {
    %c0_i32 = arith.constant 0 : i32
    %c0_i32_0 = arith.constant 0 : i32
    %c0_i32_1 = arith.constant 0 : i32
    return %c0_i32, %c0_i32_0 : i32, i32
  }
  func.func @transform_6(%arg0: i32) -> (i32, i32) {
    %c0_i32 = arith.constant 0 : i32
    %c0_i32_0 = arith.constant 0 : i32
    %c0_i32_1 = arith.constant 0 : i32
    return %c0_i32, %c0_i32_0 : i32, i32
  }
  func.func @transform_7(%arg0: i32) -> (i32, i32) {
    %c0_i32 = arith.constant 0 : i32
    %c0_i32_0 = arith.constant 0 : i32
    %c0_i32_1 = arith.constant 0 : i32
    return %c0_i32, %c0_i32_0 : i32, i32
  }
  func.func @transform_8(%arg0: i32) -> (i32, i32) {
    %c0_i32 = arith.constant 0 : i32
    %c0_i32_0 = arith.constant 0 : i32
    %c0_i32_1 = arith.constant 0 : i32
    return %c0_i32, %c0_i32_0 : i32, i32
  }
  func.func @transform_9(%arg0: i32) -> (i32, i32, i32) {
    %c0_i32 = arith.constant 0 : i32
    %c0_i32_0 = arith.constant 0 : i32
    %c0_i32_1 = arith.constant 0 : i32
    return %arg0, %c0_i32, %c0_i32_0 : i32, i32, i32
  }
}

</mosaic_0001>

<llo_original>
// kernel: transformer_block_pallas.1
$region0: #{transformer_block_pallas.1}
  #allocation0 [shape = 'u32[]', space=smem, size = 0x4, offset = 0x4, fixed_abs, tag = 'smem constant byte address 0x4 - core index']
  #allocation1 [shape = 'u32[144,128]{1,0:T(1,128)}', space=vmem, size = 0x12000, scoped, tag = 'internal scratch']
  %s0 = inlined_call_operand.vmem [shape: f32[2,8,128], index: 0, kind: input, shape index: {}]
  %s1 = inlined_call_operand.vmem [shape: bf16[128,448], index: 1, kind: input, shape index: {}]
  %s2 = inlined_call_operand.vmem [shape: bf16[128,128], index: 2, kind: input, shape index: {}]
  %s3 = inlined_call_operand.vmem [shape: bf16[128,768], index: 3, kind: input, shape index: {}]
  %s4 = inlined_call_operand.hbm [shape: bf16[384,128], index: 4, kind: input, shape index: {}]
  %s5 = inlined_call_operand.vmem [shape: f32[1,128], index: 5, kind: input, shape index: {}]
  %s6 = inlined_call_operand.vmem [shape: f32[1,128], index: 6, kind: input, shape index: {}]
  %s7 = inlined_call_operand.vmem [shape: f32[8,192], index: 7, kind: input, shape index: {}]
  %s8 = inlined_call_operand.hbm [shape: f32[8,192], index: 8, kind: input, shape index: {}]
  %s9 = inlined_call_operand.hbm [shape: f32[2,8,128], index: 9, kind: output, shape index: {}]
  %s10 = sld [smem:[#allocation0]]
  $region77: #{transformer_block_pallas.1} parent=0
    _
  %s12 = ssub.s32 1, %s10
  %s13 = scalar_select 0, %s12, %s10
  $region1: #{transformer_block_pallas.1} parent=0
    #allocation2 [shape = 'u8[98304]{0}', space=vmem, size = 0x18000, scoped, tag = 'input window, operand 4, single buffered']
    #allocation3 [shape = 's32[2]{0}', space=sflag, size = 0x8, scoped, tag = 'scoped memory for transformer_block_pallas.1']
    #allocation4 [shape = 's32[2]{0}', space=sflag, size = 0x8, scoped, tag = 'scoped memory for transformer_block_pallas.1']
    #allocation5 [shape = 'u8[8192]{0}', space=vmem, size = 0x2000, scoped, tag = 'input window, operand 8, single buffered']
    #allocation6 [shape = 's32[1]{0}', space=sflag, size = 0x4, scoped, tag = 'scoped memory for transformer_block_pallas.1']
    #allocation7 [shape = 'u8[8192]{0}', space=vmem, size = 0x2000, scoped, tag = 'output window, operand 0']
    %14 = vsyncpa [#allocation3], 0
    %15 = vsyncpa [#allocation6], 0
    %16 = vsyncpa [#allocation4], 0
    %s17 = scalar_lea.sflag [#allocation4], 1
    %18 = vsyncpa %s17, 0
    loop: start=0, step=1, limit=4
    $region2: #{transformer_block_pallas.1} parent=1 // loop_pre_header
      _
    $region3: #{transformer_block_pallas.1} parent=1 // loop_header
      %s20 = sphi 0, %s24
      %p21 = scmp.ge.s32.totalorder %s20, 4
      %s30 = sphi 0, %s32
      %s33 = sphi 0, %s30
      %s34 = sphi 0, %s33
      %s50 = sphi 0, %s34
      %s54 = sphi 0, %s54
      %s56 = sphi 0, %s54
      %s57 = sphi 0, %s56
      %s71 = sphi 0, %s57
      %s75 = sphi 0, %s75
      %s77 = sphi 0, %s75
      %s78 = sphi 0, %s77
      %s92 = sphi 0, %s78
      %s96 = sphi 0, %s96
      %s98 = sphi 0, %s96
      %s99 = sphi 0, %s98
      %s113 = sphi 0, %s99
      %s117 = sphi 0, %s117
      %s119 = sphi 0, %s117
      %s120 = sphi 0, %s119
      %s134 = sphi 0, %s120
      %s138 = sphi 0, %s138
      %s140 = sphi 0, %s138
      %s141 = sphi 0, %s140
      %s155 = sphi 0, %s141
      %s159 = sphi 0, %s159
      %s161 = sphi 0, %s159
      %s162 = sphi 0, %s161
      %s176 = sphi 0, %s162
      %s180 = sphi 0, %s180
      %s182 = sphi 0, %s180
      %s183 = sphi 0, %s182
      %s197 = sphi 0, %s183
      %s201 = sphi 0, %s201
      %s203 = sphi 0, %s201
      %s204 = sphi 0, %s203
      %s218 = sphi 0, %s204
      %s224 = sphi 0, %s226
      %s227 = sphi 0, %s224
      %s228 = sphi 0, %s227
      %s244 = sphi 0, %s228
    $region4: #{transformer_block_pallas.1} parent=1 // loop_header_branch
      %23 = sbr.rel (%p21) target = $region8
    $region5: #{transformer_block_pallas.1} parent=1 // loop_body
      %s25 = ssub.s32 %s20, 1
      %s26 = ssub.s32 %s20, 2
      %s27 = sadd.s32 %s20, 1
      %s28 = ssub.s32 %s20, %s27
      %p29 = scmp.eq.s32.totalorder %s28, 0
      %s31 = sadd.s32 %s30, 1
      %s32 = scalar_select %p29, %s30, %s31
      %p35 = pneg %p29
      %p36 = scmp.eq.s32.totalorder %s20, 1
      %p37 = por %p35, %p36
      %p38 = scmp.ne.s32.totalorder %s30, %s33
      %p39 = scmp.eq.s32.totalorder %s20, 0
      %p40 = por %p38, %p39
      %p41 = scmp.ne.s32.totalorder %s30, %s33
      %p42 = scmp.eq.s32.totalorder %s25, 1
      %p43 = por %p41, %p42
      %p44 = scmp.ne.s32.totalorder %s33, %s34
      %p45 = scmp.eq.s32.totalorder %s25, 0
      %p46 = por %p44, %p45
      %p47 = scmp.ne.s32.totalorder %s33, %s34
      %p48 = scmp.eq.s32.totalorder %s26, 1
      %p49 = por %p47, %p48
      %p51 = scmp.ne.s32.totalorder %s34, %s50
      %p52 = scmp.eq.s32.totalorder %s26, 0
      %p53 = por %p51, %p52
      %s55 = sadd.s32 %s54, 1
      %p58 = scmp.eq.s32.totalorder %s20, 1
      %p59 = scmp.ne.s32.totalorder %s54, %s56
      %p60 = scmp.eq.s32.totalorder %s20, 0
      %p61 = por %p59, %p60
      %p62 = scmp.ne.s32.totalorder %s54, %s56
      %p63 = scmp.eq.s32.totalorder %s25, 1
      %p64 = por %p62, %p63
      %p65 = scmp.ne.s32.totalorder %s56, %s57
      %p66 = scmp.eq.s32.totalorder %s25, 0
      %p67 = por %p65, %p66
      %p68 = scmp.ne.s32.totalorder %s56, %s57
      %p69 = scmp.eq.s32.totalorder %s26, 1
      %p70 = por %p68, %p69
      %p72 = scmp.ne.s32.totalorder %s57, %s71
      %p73 = scmp.eq.s32.totalorder %s26, 0
      %p74 = por %p72, %p73
      %s76 = sadd.s32 %s75, 1
      %p79 = scmp.eq.s32.totalorder %s20, 1
      %p80 = scmp.ne.s32.totalorder %s75, %s77
      %p81 = scmp.eq.s32.totalorder %s20, 0
      %p82 = por %p80, %p81
      %p83 = scmp.ne.s32.totalorder %s75, %s77
      %p84 = scmp.eq.s32.totalorder %s25, 1
      %p85 = por %p83, %p84
      %p86 = scmp.ne.s32.totalorder %s77, %s78
      %p87 = scmp.eq.s32.totalorder %s25, 0
      %p88 = por %p86, %p87
      %p89 = scmp.ne.s32.totalorder %s77, %s78
      %p90 = scmp.eq.s32.totalorder %s26, 1
      %p91 = por %p89, %p90
      %p93 = scmp.ne.s32.totalorder %s78, %s92
      %p94 = scmp.eq.s32.totalorder %s26, 0
      %p95 = por %p93, %p94
      %s97 = sadd.s32 %s96, 1
      %p100 = scmp.eq.s32.totalorder %s20, 1
      %p101 = scmp.ne.s32.totalorder %s96, %s98
      %p102 = scmp.eq.s32.totalorder %s20, 0
      %p103 = por %p101, %p102
      %p104 = scmp.ne.s32.totalorder %s96, %s98
      %p105 = scmp.eq.s32.totalorder %s25, 1
      %p106 = por %p104, %p105
      %p107 = scmp.ne.s32.totalorder %s98, %s99
      %p108 = scmp.eq.s32.totalorder %s25, 0
      %p109 = por %p107, %p108
      %p110 = scmp.ne.s32.totalorder %s98, %s99
      %p111 = scmp.eq.s32.totalorder %s26, 1
      %p112 = por %p110, %p111
      %p114 = scmp.ne.s32.totalorder %s99, %s113
      %p115 = scmp.eq.s32.totalorder %s26, 0
      %p116 = por %p114, %p115
      %s118 = sadd.s32 %s117, 1
      %p121 = scmp.eq.s32.totalorder %s20, 1
      %p122 = scmp.ne.s32.totalorder %s117, %s119
      %p123 = scmp.eq.s32.totalorder %s20, 0
      %p124 = por %p122, %p123
      %p125 = scmp.ne.s32.totalorder %s117, %s119
      %p126 = scmp.eq.s32.totalorder %s25, 1
      %p127 = por %p125, %p126
      %p128 = scmp.ne.s32.totalorder %s119, %s120
      %p129 = scmp.eq.s32.totalorder %s25, 0
      %p130 = por %p128, %p129
      %p131 = scmp.ne.s32.totalorder %s119, %s120
      %p132 = scmp.eq.s32.totalorder %s26, 1
      %p133 = por %p131, %p132
      %p135 = scmp.ne.s32.totalorder %s120, %s134
      %p136 = scmp.eq.s32.totalorder %s26, 0
      %p137 = por %p135, %p136
      %s139 = sadd.s32 %s138, 1
      %p142 = scmp.eq.s32.totalorder %s20, 1
      %p143 = scmp.ne.s32.totalorder %s138, %s140
      %p144 = scmp.eq.s32.totalorder %s20, 0
      %p145 = por %p143, %p144
      %p146 = scmp.ne.s32.totalorder %s138, %s140
      %p147 = scmp.eq.s32.totalorder %s25, 1
      %p148 = por %p146, %p147
      %p149 = scmp.ne.s32.totalorder %s140, %s141
      %p150 = scmp.eq.s32.totalorder %s25, 0
      %p151 = por %p149, %p150
      %p152 = scmp.ne.s32.totalorder %s140, %s141
      %p153 = scmp.eq.s32.totalorder %s26, 1
      %p154 = por %p152, %p153
      %p156 = scmp.ne.s32.totalorder %s141, %s155
      %p157 = scmp.eq.s32.totalorder %s26, 0
      %p158 = por %p156, %p157
      %s160 = sadd.s32 %s159, 1
      %p163 = scmp.eq.s32.totalorder %s20, 1
      %p164 = scmp.ne.s32.totalorder %s159, %s161
      %p165 = scmp.eq.s32.totalorder %s20, 0
      %p166 = por %p164, %p165
      %p167 = scmp.ne.s32.totalorder %s159, %s161
      %p168 = scmp.eq.s32.totalorder %s25, 1
      %p169 = por %p167, %p168
      %p170 = scmp.ne.s32.totalorder %s161, %s162
      %p171 = scmp.eq.s32.totalorder %s25, 0
      %p172 = por %p170, %p171
      %p173 = scmp.ne.s32.totalorder %s161, %s162
      %p174 = scmp.eq.s32.totalorder %s26, 1
      %p175 = por %p173, %p174
      %p177 = scmp.ne.s32.totalorder %s162, %s176
      %p178 = scmp.eq.s32.totalorder %s26, 0
      %p179 = por %p177, %p178
      %s181 = sadd.s32 %s180, 1
      %p184 = scmp.eq.s32.totalorder %s20, 1
      %p185 = scmp.ne.s32.totalorder %s180, %s182
      %p186 = scmp.eq.s32.totalorder %s20, 0
      %p187 = por %p185, %p186
      %p188 = scmp.ne.s32.totalorder %s180, %s182
      %p189 = scmp.eq.s32.totalorder %s25, 1
      %p190 = por %p188, %p189
      %p191 = scmp.ne.s32.totalorder %s182, %s183
      %p192 = scmp.eq.s32.totalorder %s25, 0
      %p193 = por %p191, %p192
      %p194 = scmp.ne.s32.totalorder %s182, %s183
      %p195 = scmp.eq.s32.totalorder %s26, 1
      %p196 = por %p194, %p195
      %p198 = scmp.ne.s32.totalorder %s183, %s197
      %p199 = scmp.eq.s32.totalorder %s26, 0
      %p200 = por %p198, %p199
      %s202 = sadd.s32 %s201, 1
      %p205 = scmp.eq.s32.totalorder %s20, 1
      %p206 = scmp.ne.s32.totalorder %s201, %s203
      %p207 = scmp.eq.s32.totalorder %s20, 0
      %p208 = por %p206, %p207
      %p209 = scmp.ne.s32.totalorder %s201, %s203
      %p210 = scmp.eq.s32.totalorder %s25, 1
      %p211 = por %p209, %p210
      %p212 = scmp.ne.s32.totalorder %s203, %s204
      %p213 = scmp.eq.s32.totalorder %s25, 0
      %p214 = por %p212, %p213
      %p215 = scmp.ne.s32.totalorder %s203, %s204
      %p216 = scmp.eq.s32.totalorder %s26, 1
      %p217 = por %p215, %p216
      %p219 = scmp.ne.s32.totalorder %s204, %s218
      %p220 = scmp.eq.s32.totalorder %s26, 0
      %p221 = por %p219, %p220
      %s222 = ssub.s32 %s20, %s27
      %p223 = scmp.eq.s32.totalorder %s222, 0
      %s225 = sadd.s32 %s224, 1
      %s226 = scalar_select %p223, %s224, %s225
      %p229 = pneg %p223
      %p230 = scmp.eq.s32.totalorder %s20, 1
      %p231 = por %p229, %p230
      %p232 = scmp.ne.s32.totalorder %s224, %s227
      %p233 = scmp.eq.s32.totalorder %s20, 0
      %p234 = por %p232, %p233
      %p235 = scmp.ne.s32.totalorder %s224, %s227
      %p236 = scmp.eq.s32.totalorder %s25, 1
      %p237 = por %p235, %p236
      %p238 = scmp.ne.s32.totalorder %s227, %s228
      %p239 = scmp.eq.s32.totalorder %s25, 0
      %p240 = por %p238, %p239
      %p241 = scmp.ne.s32.totalorder %s227, %s228
      %p242 = scmp.eq.s32.totalorder %s26, 1
      %p243 = por %p241, %p242
      %p245 = scmp.ne.s32.totalorder %s228, %s244
      %p246 = scmp.eq.s32.totalorder %s26, 0
      %p247 = por %p245, %p246
      %p248 = scmp.le.s32.totalorder 1, %s20
      %p249 = scmp.lt.s32.totalorder %s20, 3
      %p250 = pnand %p248, %p249
      %p251 = pneg %p250
      // Predicated region
      $region9: #{transformer_block_pallas.1} parent=5 // pred_check
        _
      $region10: #{transformer_block_pallas.1} parent=5 // pred_check_branch
        %253 = sbr.rel (%p250) target = $region12
      $region11: #{transformer_block_pallas.1} parent=5 // pred_region
        %s254 = ssub.s32 %s20, 1
        // Predicated region
        $region13: #{transformer_block_pallas.1} parent=11 // pred_check
          %p255 = pneg %p67
        $region14: #{transformer_block_pallas.1} parent=11 // pred_check_branch
          %257 = sbr.rel (%p255) target = $region16
        $region15: #{transformer_block_pallas.1} parent=11 // pred_region
          _
        $region16: #{transformer_block_pallas.1} parent=11 // pred_fallthru
          _
        // Predicated region
        $region17: #{transformer_block_pallas.1} parent=11 // pred_check
          %p258 = pneg %p88
        $region18: #{transformer_block_pallas.1} parent=11 // pred_check_branch
          %260 = sbr.rel (%p258) target = $region20
        $region19: #{transformer_block_pallas.1} parent=11 // pred_region
          _
        $region20: #{transformer_block_pallas.1} parent=11 // pred_fallthru
          _
        // Predicated region
        $region21: #{transformer_block_pallas.1} parent=11 // pred_check
          %p261 = pneg %p109
        $region22: #{transformer_block_pallas.1} parent=11 // pred_check_branch
          %263 = sbr.rel (%p261) target = $region24
        $region23: #{transformer_block_pallas.1} parent=11 // pred_region
          _
        $region24: #{transformer_block_pallas.1} parent=11 // pred_fallthru
          _
        // Predicated region
        $region25: #{transformer_block_pallas.1} parent=11 // pred_check
          %p264 = pneg %p130
        $region26: #{transformer_block_pallas.1} parent=11 // pred_check_branch
          %266 = sbr.rel (%p264) target = $region28
        $region27: #{transformer_block_pallas.1} parent=11 // pred_region
          %s268 = ssub.s32 3072, 3072
          %269 = vsyncadd [#allocation3], %s268
          %s270 = sshll.u32 [#allocation2], 4
          %s271 = int_to_ptr.vmem [resolvable:$true] %s270
          %276 = dma.hbm_to_vmem [thread:$0]  %s4, 3072, %s271, [#allocation3], 64, 64, 4
        $region28: #{transformer_block_pallas.1} parent=11 // pred_fallthru
          _
        // Predicated region
        $region29: #{transformer_block_pallas.1} parent=11 // pred_check
          %p277 = pneg %p151
        $region30: #{transformer_block_pallas.1} parent=11 // pred_check_branch
          %279 = sbr.rel (%p277) target = $region32
        $region31: #{transformer_block_pallas.1} parent=11 // pred_region
          _
        $region32: #{transformer_block_pallas.1} parent=11 // pred_fallthru
          _
        // Predicated region
        $region33: #{transformer_block_pallas.1} parent=11 // pred_check
          %p280 = pneg %p172
        $region34: #{transformer_block_pallas.1} parent=11 // pred_check_branch
          %282 = sbr.rel (%p280) target = $region36
        $region35: #{transformer_block_pallas.1} parent=11 // pred_region
          _
        $region36: #{transformer_block_pallas.1} parent=11 // pred_fallthru
          _
        // Predicated region
        $region37: #{transformer_block_pallas.1} parent=11 // pred_check
          %p283 = pneg %p193
        $region38: #{transformer_block_pallas.1} parent=11 // pred_check_branch
          %285 = sbr.rel (%p283) target = $region40
        $region39: #{transformer_block_pallas.1} parent=11 // pred_region
          _
        $region40: #{transformer_block_pallas.1} parent=11 // pred_fallthru
          _
        // Predicated region
        $region41: #{transformer_block_pallas.1} parent=11 // pred_check
          %p286 = pneg %p214
        $region42: #{transformer_block_pallas.1} parent=11 // pred_check_branch
          %288 = sbr.rel (%p286) target = $region44
        $region43: #{transformer_block_pallas.1} parent=11 // pred_region
          %s290 = ssub.s32 256, 256
          %291 = vsyncadd [#allocation6], %s290
          %s293 = sshll.u32 [#allocation5], 4
          %s294 = int_to_ptr.vmem [resolvable:$true] %s293
          %296 = dma.hbm_to_vmem [thread:$0]  %s8, 256, %s294, [#allocation6]
        $region44: #{transformer_block_pallas.1} parent=11 // pred_fallthru
          _
      $region12: #{transformer_block_pallas.1} parent=5 // pred_fallthru
        _
      %p297 = scmp.lt.s32.totalorder %s20, 2
      // Predicated region
      $region45: #{transformer_block_pallas.1} parent=5 // pred_check
        %p298 = pneg %p297
      $region46: #{transformer_block_pallas.1} parent=5 // pred_check_branch
        %300 = sbr.rel (%p298) target = $region48
      $region47: #{transformer_block_pallas.1} parent=5 // pred_region
        // Predicated region
        $region49: #{transformer_block_pallas.1} parent=47 // pred_check
          %p301 = pneg %p40
        $region50: #{transformer_block_pallas.1} parent=47 // pred_check_branch
          %303 = sbr.rel (%p301) target = $region52
        $region51: #{transformer_block_pallas.1} parent=47 // pred_region
          %p304 = scmp.lt.s32.totalorder %s20, 1
          %s305 = scalar_select %p304, %s20, 1
          %s306 = smul.addr %s305, 8
          %s307 = scalar_lea.vmem %s0, %s306
        $region52: #{transformer_block_pallas.1} parent=47 // pred_fallthru
          _
      $region48: #{transformer_block_pallas.1} parent=5 // pred_fallthru
        _
      %p308 = scmp.le.s32.totalorder 1, %s20
      %p309 = scmp.lt.s32.totalorder %s20, 3
      %p310 = pnand %p308, %p309
      %p311 = pneg %p310
      // Predicated region
      $region53: #{transformer_block_pallas.1} parent=5 // pred_check
        _
      $region54: #{transformer_block_pallas.1} parent=5 // pred_check_branch
        %313 = sbr.rel (%p310) target = $region56
      $region55: #{transformer_block_pallas.1} parent=5 // pred_region
        %s314 = ssub.s32 %s20, 1
        // Predicated region
        $region57: #{transformer_block_pallas.1} parent=55 // pred_check
          %p315 = pneg %p130
        $region58: #{transformer_block_pallas.1} parent=55 // pred_check_branch
          %317 = sbr.rel (%p315) target = $region60
        $region59: #{transformer_block_pallas.1} parent=55 // pred_region
          %318 = dma.done [#allocation3], 3072
        $region60: #{transformer_block_pallas.1} parent=55 // pred_fallthru
          _
        // Predicated region
        $region61: #{transformer_block_pallas.1} parent=55 // pred_check
          %p319 = pneg %p214
        $region62: #{transformer_block_pallas.1} parent=55 // pred_check_branch
          %321 = sbr.rel (%p319) target = $region64
        $region63: #{transformer_block_pallas.1} parent=55 // pred_region
          %322 = dma.done [#allocation6], 256
        $region64: #{transformer_block_pallas.1} parent=55 // pred_fallthru
          _
        %p323 = scmp.lt.s32.totalorder %s25, 1
        %s324 = scalar_select %p323, %s25, 1
        %s325 = smul.addr %s324, 8
        %s326 = scalar_lea.vmem %s0, %s325
        %p327 = pneg %p46
        %p328 = pneg %p43
        %p329 = pneg %p67
        %p330 = pneg %p64
        %p331 = pneg %p88
        %p332 = pneg %p85
        %p333 = pneg %p109
        %p334 = pneg %p106
        %p335 = pneg %p130
        %p336 = pneg %p127
        %p337 = pneg %p151
        %p338 = pneg %p148
        %p339 = pneg %p172
        %p340 = pneg %p169
        %p341 = pneg %p193
        %p342 = pneg %p190
        %p343 = pneg %p214
        %p344 = pneg %p211
        %p345 = pneg %p240
        %p346 = pneg %p237
        %s347 = sand.u32 %s227, 1
        %s348 = scalar_lea.sflag [#allocation4], %s347
        %s349 = sand.u32 %s227, 1
        %s350 = smul.addr %s349, 8
        %s351 = scalar_lea.vmem [#allocation7], %s350
        %p352 = scmp.lt.s32.totalorder %s25, 1
        %s353 = scalar_select %p352, %s25, 1
        %s354 = smul.addr %s353, 8
        %s355 = scalar_lea.vmem %s0, %s354
        %v357 = vld [vmem:[%s355] sm:$0xff]
        %v358 = vld [vmem:[%s5] sm:$0x1]
        %v359 = vmul.f32 %v357, %v357
        %360 = vadd.xlane.f32.xlu0 %v359
        %v361 = vpop.xlane.xlu0 %360
        %v362 = vrcp.pop 128.0
        %v363 = vmul.f32 %v361, %v362
        %v364 = vadd.f32 %v363, 1e-05
        %v365 = vrsqrt.pop %v364
        %v366 = vmul.f32 %v357, %v365
        %v368 = vlaneseq
        %v369 = vshrl.u32 %v368, 7
        %v370 = vsub.s32 0, %v369
        %v371 = vrot.slane %v358, %v370
        %v373 = vmul.f32 %v371, %v366
        %v374 = vpack.c.bf16 %v373, %v373
        %v375 = vld [vmem:[%s1] sm:$0xff]
        %v376 = vld [vmem:[%s1 + $0x8] sm:$0xff]
        %v377 = vld [vmem:[%s1 + $0x10] sm:$0xff]
        %v378 = vld [vmem:[%s1 + $0x18] sm:$0xff]
        %v379 = vld [vmem:[%s1 + $0x20] sm:$0xff]
        %v380 = vld [vmem:[%s1 + $0x28] sm:$0xff]
        %v381 = vld [vmem:[%s1 + $0x30] sm:$0xff]
        %v382 = vld [vmem:[%s1 + $0x38] sm:$0xff]
        %v383 = vld [vmem:[%s1 + $0x40] sm:$0xff]
        %v384 = vld [vmem:[%s1 + $0x48] sm:$0xff]
        %v385 = vld [vmem:[%s1 + $0x50] sm:$0xff]
        %v386 = vld [vmem:[%s1 + $0x58] sm:$0xff]
        %v387 = vld [vmem:[%s1 + $0x60] sm:$0xff]
        %v388 = vld [vmem:[%s1 + $0x68] sm:$0xff]
        %v389 = vld [vmem:[%s1 + $0x70] sm:$0xff]
        %v390 = vld [vmem:[%s1 + $0x78] sm:$0xff]
        %v391 = vld [vmem:[%s1 + $0x80] sm:$0xff]
        %v392 = vld [vmem:[%s1 + $0x88] sm:$0xff]
        %v393 = vld [vmem:[%s1 + $0x90] sm:$0xff]
        %v394 = vld [vmem:[%s1 + $0x98] sm:$0xff]
        %v395 = vld [vmem:[%s1 + $0xa0] sm:$0xff]
        %v396 = vld [vmem:[%s1 + $0xa8] sm:$0xff]
        %v397 = vld [vmem:[%s1 + $0xb0] sm:$0xff]
        %v398 = vld [vmem:[%s1 + $0xb8] sm:$0xff]
        %v399 = vld [vmem:[%s1 + $0xc0] sm:$0xff]
        %v400 = vld [vmem:[%s1 + $0xc8] sm:$0xff]
        %v401 = vld [vmem:[%s1 + $0xd0] sm:$0xff]
        %v402 = vld [vmem:[%s1 + $0xd8] sm:$0xff]
        %v403 = vld [vmem:[%s1 + $0xe0] sm:$0xff]
        %v404 = vld [vmem:[%s1 + $0xe8] sm:$0xff]
        %v405 = vld [vmem:[%s1 + $0xf0] sm:$0xff]
        %v406 = vld [vmem:[%s1 + $0xf8] sm:$0xff]
        %v439 = vunpack.c.l.b16 %v375
        %v440 = vunpack.c.h.b16 %v375
        %v441 = vunpack.c.l.b16 %v376
        %v442 = vunpack.c.h.b16 %v376
        %v443 = vunpack.c.l.b16 %v377
        %v444 = vunpack.c.h.b16 %v377
        %v445 = vunpack.c.l.b16 %v378
        %v446 = vunpack.c.h.b16 %v378
        %v447 = vunpack.c.l.b16 %v379
        %v448 = vunpack.c.h.b16 %v379
        %v449 = vunpack.c.l.b16 %v380
        %v450 = vunpack.c.h.b16 %v380
        %v451 = vunpack.c.l.b16 %v381
        %v452 = vunpack.c.h.b16 %v381
        %v453 = vunpack.c.l.b16 %v382
        %v454 = vunpack.c.h.b16 %v382
        %v455 = vunpack.c.l.b16 %v383
        %v456 = vunpack.c.h.b16 %v383
        %v457 = vunpack.c.l.b16 %v384
        %v458 = vunpack.c.h.b16 %v384
        %v459 = vunpack.c.l.b16 %v385
        %v460 = vunpack.c.h.b16 %v385
        %v461 = vunpack.c.l.b16 %v386
        %v462 = vunpack.c.h.b16 %v386
        %v463 = vunpack.c.l.b16 %v387
        %v464 = vunpack.c.h.b16 %v387
        %v465 = vunpack.c.l.b16 %v388
        %v466 = vunpack.c.h.b16 %v388
        %v467 = vunpack.c.l.b16 %v389
        %v468 = vunpack.c.h.b16 %v389
        %v469 = vunpack.c.l.b16 %v390
        %v470 = vunpack.c.h.b16 %v390
        %v471 = vunpack.c.l.b16 %v391
        %v472 = vunpack.c.h.b16 %v391
        %v473 = vunpack.c.l.b16 %v392
        %v474 = vunpack.c.h.b16 %v392
        %v475 = vunpack.c.l.b16 %v393
        %v476 = vunpack.c.h.b16 %v393
        %v477 = vunpack.c.l.b16 %v394
        %v478 = vunpack.c.h.b16 %v394
        %v479 = vunpack.c.l.b16 %v395
        %v480 = vunpack.c.h.b16 %v395
        %v481 = vunpack.c.l.b16 %v396
        %v482 = vunpack.c.h.b16 %v396
        %v483 = vunpack.c.l.b16 %v397
        %v484 = vunpack.c.h.b16 %v397
        %v485 = vunpack.c.l.b16 %v398
        %v486 = vunpack.c.h.b16 %v398
        %v487 = vunpack.c.l.b16 %v399
        %v488 = vunpack.c.h.b16 %v399
        %v489 = vunpack.c.l.b16 %v400
        %v490 = vunpack.c.h.b16 %v400
        %v491 = vunpack.c.l.b16 %v401
        %v492 = vunpack.c.h.b16 %v401
        %v493 = vunpack.c.l.b16 %v402
        %v494 = vunpack.c.h.b16 %v402
        %v495 = vunpack.c.l.b16 %v403
        %v496 = vunpack.c.h.b16 %v403
        %v497 = vunpack.c.l.b16 %v404
        %v498 = vunpack.c.h.b16 %v404
        %v499 = vunpack.c.l.b16 %v405
        %v500 = vunpack.c.h.b16 %v405
        %v501 = vunpack.c.l.b16 %v406
        %v502 = vunpack.c.h.b16 %v406
        %v503 = vpack.c.b16 %v443, %v439
        %v504 = vpack.c.b16 %v444, %v440
        %v505 = vpack.c.b16 %v445, %v441
        %v506 = vpack.c.b16 %v446, %v442
        %v507 = vpack.c.b16 %v451, %v447
        %v508 = vpack.c.b16 %v452, %v448
        %v509 = vpack.c.b16 %v453, %v449
        %v510 = vpack.c.b16 %v454, %v450
        %v511 = vpack.c.b16 %v459, %v455
        %v512 = vpack.c.b16 %v460, %v456
        %v513 = vpack.c.b16 %v461, %v457
        %v514 = vpack.c.b16 %v462, %v458
        %v515 = vpack.c.b16 %v467, %v463
        %v516 = vpack.c.b16 %v468, %v464
        %v517 = vpack.c.b16 %v469, %v465
        %v518 = vpack.c.b16 %v470, %v466
        %v519 = vpack.c.b16 %v475, %v471
        %v520 = vpack.c.b16 %v476, %v472
        %v521 = vpack.c.b16 %v477, %v473
        %v522 = vpack.c.b16 %v478, %v474
        %v523 = vpack.c.b16 %v483, %v479
        %v524 = vpack.c.b16 %v484, %v480
        %v525 = vpack.c.b16 %v485, %v481
        %v526 = vpack.c.b16 %v486, %v482
        %v527 = vpack.c.b16 %v491, %v487
        %v528 = vpack.c.b16 %v492, %v488
        %v529 = vpack.c.b16 %v493, %v489
        %v530 = vpack.c.b16 %v494, %v490
        %v531 = vpack.c.b16 %v499, %v495
        %v532 = vpack.c.b16 %v500, %v496
        %v533 = vpack.c.b16 %v501, %v497
        %v534 = vpack.c.b16 %v502, %v498
        %567 = vmatprep.subr.bf16.mxu0 %v532
        %568 = vmatpush1.bf16.msra.mxu0 %v531
        %569 = vmatprep.subr.bf16.mxu0 %v528
        %570 = vmatpush1.bf16.msra.mxu0 %v527
        %571 = vmatprep.subr.bf16.mxu0 %v524
        %572 = vmatpush1.bf16.msra.mxu0 %v523
        %573 = vmatprep.subr.bf16.mxu0 %v520
        %574 = vmatpush1.bf16.msra.mxu0 %v519
        %575 = vmatprep.subr.bf16.mxu0 %v516
        %576 = vmatpush1.bf16.msra.mxu0 %v515
        %577 = vmatprep.subr.bf16.mxu0 %v512
        %578 = vmatpush1.bf16.msra.mxu0 %v511
        %579 = vmatprep.subr.bf16.mxu0 %v508
        %580 = vmatpush1.bf16.msra.mxu0 %v507
        %581 = vmatprep.subr.bf16.mxu0 %v504
        %582 = vmatpush1.bf16.msra.mxu0 %v503
        %583 = vmatprep.subr.bf16.mxu0 0
        %584 = vmatpush2.bf16.msra.mxu0 0
        %585 = vmatprep.subr.bf16.mxu0 0
        %586 = vmatpush2.bf16.msra.mxu0 0
        %587 = vmatprep.subr.bf16.mxu0 0
        %588 = vmatpush2.bf16.msra.mxu0 0
        %589 = vmatprep.subr.bf16.mxu0 0
        %590 = vmatpush2.bf16.msra.mxu0 0
        %591 = vmatprep.subr.bf16.mxu0 0
        %592 = vmatpush2.bf16.msra.mxu0 0
        %593 = vmatprep.subr.bf16.mxu0 0
        %594 = vmatpush2.bf16.msra.mxu0 0
        %595 = vmatprep.subr.bf16.mxu0 0
        %596 = vmatpush2.bf16.msra.mxu0 0
        %597 = vmatprep.subr.bf16.mxu0 0
        %598 = vmatpush2.bf16.msra.mxu0 0
        %599 = vmatprep.mubr.bf16.mxu0 0
        %600 = vmatmul.mubr.bf16.gmra.mxu0 %v374
        %v601 = vpop.f32.mrf.mxu0
        %v602 = vadd.f32 0.0, %v601
        %v603 = vpop.f32.mrf.mxu0
        %v604 = vadd.f32 0.0, %v603
        %v605 = vpop.f32.mrf.mxu0
        %v606 = vpop.f32.mrf.mxu0
        %607 = vdwg.mxu0
        %608 = vmatprep.subr.bf16.mxu0 %v534
        %609 = vmatpush1.bf16.msra.mxu0 %v533
        %610 = vmatprep.subr.bf16.mxu0 %v530
        %611 = vmatpush1.bf16.msra.mxu0 %v529
        %612 = vmatprep.subr.bf16.mxu0 %v526
        %613 = vmatpush1.bf16.msra.mxu0 %v525
        %614 = vmatprep.subr.bf16.mxu0 %v522
        %615 = vmatpush1.bf16.msra.mxu0 %v521
        %616 = vmatprep.subr.bf16.mxu0 %v518
        %617 = vmatpush1.bf16.msra.mxu0 %v517
        %618 = vmatprep.subr.bf16.mxu0 %v514
        %619 = vmatpush1.bf16.msra.mxu0 %v513
        %620 = vmatprep.subr.bf16.mxu0 %v510
        %621 = vmatpush1.bf16.msra.mxu0 %v509
        %622 = vmatprep.subr.bf16.mxu0 %v506
        %623 = vmatpush1.bf16.msra.mxu0 %v505
        %624 = vmatprep.subr.bf16.mxu0 0
        %625 = vmatpush2.bf16.msra.mxu0 0
        %626 = vmatprep.subr.bf16.mxu0 0
        %627 = vmatpush2.bf16.msra.mxu0 0
        %628 = vmatprep.subr.bf16.mxu0 0
        %629 = vmatpush2.bf16.msra.mxu0 0
        %630 = vmatprep.subr.bf16.mxu0 0
        %631 = vmatpush2.bf16.msra.mxu0 0
        %632 = vmatprep.subr.bf16.mxu0 0
        %633 = vmatpush2.bf16.msra.mxu0 0
        %634 = vmatprep.subr.bf16.mxu0 0
        %635 = vmatpush2.bf16.msra.mxu0 0
        %636 = vmatprep.subr.bf16.mxu0 0
        %637 = vmatpush2.bf16.msra.mxu0 0
        %638 = vmatprep.subr.bf16.mxu0 0
        %639 = vmatpush2.bf16.msra.mxu0 0
        %640 = vmatprep.mubr.bf16.mxu0 0
        %641 = vmatmul.mubr.bf16.gmra.mxu0 %v374
        %v642 = vpop.f32.mrf.mxu0
        %v643 = vadd.f32 0.0, %v642
        %v644 = vpop.f32.mrf.mxu0
        %v645 = vadd.f32 0.0, %v644
        %v646 = vpop.f32.mrf.mxu0
        %v647 = vpop.f32.mrf.mxu0
        %648 = vdwg.mxu0
        %v649 = vld [vmem:[%s7] sm:$0xff]
        %v650 = vld [vmem:[%s7 + $0x8] sm:$0xff]
        %v651 = vmul.f32 %v602, %v649
        %v652 = vmul.f32 %v604, %v650
        %v653 = vld [vmem:[#allocation5] sm:$0xff]
        %v654 = vld [vmem:[#allocation5 + $0x8] sm:$0xff]
        %v655 = vmul.f32 %v643, %v653
        %v656 = vmul.f32 %v645, %v654
        %v657 = vadd.f32 %v651, %v655
        %v658 = vadd.f32 %v652, %v656
        %v659 = vpack.c.bf16 %v657, %v657
        %v660 = vpack.c.bf16 %v658, %v658
        %v661 = vpack.c.bf16 %v604, %v604
        %v662 = vlaneseq
        %v663 = vshrl.u32 %v662, 7
        %v664 = vlaneseq
        %v665 = vand.u32 %v664, 127
        %vm666 = vcmp.gt.s32.totalorder %v665, %v663
        %v667 = vsel %vm666, -1e+30, 0.0
        %vm668 = vcmask 261120
        %v670 = vsel %vm668, %v659, 0
        %v673 = vsel %vm668, %v660, 0
        %675 = vmatprep.subr.bf16.mxu0 0
        %676 = vmatpush1.bf16.xpose.msra.mxu0 0
        %677 = vmatprep.subr.bf16.mxu0 0
        %678 = vmatpush1.bf16.xpose.msra.mxu0 0
        %679 = vmatprep.subr.bf16.mxu0 0
        %680 = vmatpush1.bf16.xpose.msra.mxu0 0
        %681 = vmatprep.subr.bf16.mxu0 0
        %682 = vmatpush1.bf16.xpose.msra.mxu0 0
        %683 = vmatprep.subr.bf16.mxu0 0
        %684 = vmatpush1.bf16.xpose.msra.mxu0 0
        %685 = vmatprep.subr.bf16.mxu0 0
        %686 = vmatpush1.bf16.xpose.msra.mxu0 0
        %687 = vmatprep.subr.bf16.mxu0 0
        %688 = vmatpush1.bf16.xpose.msra.mxu0 0
        %689 = vmatprep.subr.bf16.mxu0 0
        %690 = vmatpush1.bf16.xpose.msra.mxu0 %v673
        %691 = vmatprep.subr.bf16.mxu0 0
        %692 = vmatpush2.bf16.xpose.msra.mxu0 0
        %693 = vmatprep.subr.bf16.mxu0 0
        %694 = vmatpush2.bf16.xpose.msra.mxu0 0
        %695 = vmatprep.subr.bf16.mxu0 0
        %696 = vmatpush2.bf16.xpose.msra.mxu0 0
        %697 = vmatprep.subr.bf16.mxu0 0
        %698 = vmatpush2.bf16.xpose.msra.mxu0 0
        %699 = vmatprep.subr.bf16.mxu0 0
        %700 = vmatpush2.bf16.xpose.msra.mxu0 0
        %701 = vmatprep.subr.bf16.mxu0 0
        %702 = vmatpush2.bf16.xpose.msra.mxu0 0
        %703 = vmatprep.subr.bf16.mxu0 0
        %704 = vmatpush2.bf16.xpose.msra.mxu0 0
        %705 = vmatprep.subr.bf16.mxu0 0
        %706 = vmatpush2.bf16.xpose.msra.mxu0 0
        %707 = vmatprep.mubr.bf16.mxu0 0
        %708 = vmatmul.mubr.bf16.gmra.mxu0 %v670
        %v709 = vpop.f32.mrf.mxu0
        %v710 = vadd.f32 %v667, %v709
        %v711 = vpop.f32.mrf.mxu0
        %v712 = vpop.f32.mrf.mxu0
        %v713 = vpop.f32.mrf.mxu0
        %714 = vdwg.mxu0
        %vm715 = vcmask 64512
        %v716 = vsel %vm715, %v710, -inf
        %717 = vmax.xlane.f32.xlu0 %v716
        %v718 = vpop.xlane.xlu0 %717
        %v719 = vsub.f32 %v710, %v718
        %v720 = vmul.f32 %v719, 1.442695
        %v721 = vpow.pop %v720
        %v722 = vsel %vm715, %v721, 0.0
        %723 = vadd.xlane.f32.xlu0 %v722
        %v724 = vpop.xlane.xlu0 %723
        %v725 = vrcp.pop %v724
        %v726 = vmul.f32 1.0, %v725
        %v727 = vmul.f32 %v721, %v726
        %v728 = vpack.c.bf16 %v727, %v727
        %730 = vrot.lane.b32.xlu0 %v661, 64
        %v731 = vpop.permute.xlu0 %730
        %v733 = vsel %vm715, %v728, 0
        %vm735 = vcmask 1043456
        %v737 = vsel %vm735, %v731, 0
        %739 = vmatprep.subr.bf16.mxu0 0
        %740 = vmatpush1.bf16.msra.mxu0 0
        %741 = vmatprep.subr.bf16.mxu0 0
        %742 = vmatpush1.bf16.msra.mxu0 0
        %743 = vmatprep.subr.bf16.mxu0 0
        %744 = vmatpush1.bf16.msra.mxu0 0
        %745 = vmatprep.subr.bf16.mxu0 0
        %746 = vmatpush1.bf16.msra.mxu0 0
        %747 = vmatprep.subr.bf16.mxu0 0
        %748 = vmatpush1.bf16.msra.mxu0 0
        %749 = vmatprep.subr.bf16.mxu0 0
        %750 = vmatpush1.bf16.msra.mxu0 0
        %751 = vmatprep.subr.bf16.mxu0 0
        %752 = vmatpush1.bf16.msra.mxu0 0
        %753 = vmatprep.subr.bf16.mxu0 0
        %754 = vmatpush1.bf16.msra.mxu0 %v737
        %755 = vmatprep.subr.bf16.mxu0 0
        %756 = vmatpush2.bf16.msra.mxu0 0
        %757 = vmatprep.subr.bf16.mxu0 0
        %758 = vmatpush2.bf16.msra.mxu0 0
        %759 = vmatprep.subr.bf16.mxu0 0
        %760 = vmatpush2.bf16.msra.mxu0 0
        %761 = vmatprep.subr.bf16.mxu0 0
        %762 = vmatpush2.bf16.msra.mxu0 0
        %763 = vmatprep.subr.bf16.mxu0 0
        %764 = vmatpush2.bf16.msra.mxu0 0
        %765 = vmatprep.subr.bf16.mxu0 0
        %766 = vmatpush2.bf16.msra.mxu0 0
        %767 = vmatprep.subr.bf16.mxu0 0
        %768 = vmatpush2.bf16.msra.mxu0 0
        %769 = vmatprep.subr.bf16.mxu0 0
        %770 = vmatpush2.bf16.msra.mxu0 0
        %771 = vmatprep.mubr.bf16.mxu0 0
        %772 = vmatmul.mubr.bf16.gmra.mxu0 %v733
        %v773 = vpop.f32.mrf.mxu0
        %v774 = vadd.f32 0.0, %v773
        %v775 = vpop.f32.mrf.mxu0
        %v776 = vpop.f32.mrf.mxu0
        %v777 = vpop.f32.mrf.mxu0
        %778 = vdwg.mxu0
        %780 = vrot.lane.b32.xlu0 %v659, 96
        %v781 = vpop.permute.xlu0 %780
        %v783 = vsel %vm668, %v781, 0
        %785 = vmatprep.subr.bf16.mxu0 0
        %786 = vmatpush1.bf16.xpose.msra.mxu0 0
        %787 = vmatprep.subr.bf16.mxu0 0
        %788 = vmatpush1.bf16.xpose.msra.mxu0 0
        %789 = vmatprep.subr.bf16.mxu0 0
        %790 = vmatpush1.bf16.xpose.msra.mxu0 0
        %791 = vmatprep.subr.bf16.mxu0 0
        %792 = vmatpush1.bf16.xpose.msra.mxu0 0
        %793 = vmatprep.subr.bf16.mxu0 0
        %794 = vmatpush1.bf16.xpose.msra.mxu0 0
        %795 = vmatprep.subr.bf16.mxu0 0
        %796 = vmatpush1.bf16.xpose.msra.mxu0 0
        %797 = vmatprep.subr.bf16.mxu0 0
        %798 = vmatpush1.bf16.xpose.msra.mxu0 0
        %799 = vmatprep.subr.bf16.mxu0 0
        %800 = vmatpush1.bf16.xpose.msra.mxu0 %v673
        %801 = vmatprep.subr.bf16.mxu0 0
        %802 = vmatpush2.bf16.xpose.msra.mxu0 0
        %803 = vmatprep.subr.bf16.mxu0 0
        %804 = vmatpush2.bf16.xpose.msra.mxu0 0
        %805 = vmatprep.subr.bf16.mxu0 0
        %806 = vmatpush2.bf16.xpose.msra.mxu0 0
        %807 = vmatprep.subr.bf16.mxu0 0
        %808 = vmatpush2.bf16.xpose.msra.mxu0 0
        %809 = vmatprep.subr.bf16.mxu0 0
        %810 = vmatpush2.bf16.xpose.msra.mxu0 0
        %811 = vmatprep.subr.bf16.mxu0 0
        %812 = vmatpush2.bf16.xpose.msra.mxu0 0
        %813 = vmatprep.subr.bf16.mxu0 0
        %814 = vmatpush2.bf16.xpose.msra.mxu0 0
        %815 = vmatprep.subr.bf16.mxu0 0
        %816 = vmatpush2.bf16.xpose.msra.mxu0 0
        %817 = vmatprep.mubr.bf16.mxu0 0
        %818 = vmatmul.mubr.bf16.gmra.mxu0 %v783
        %v819 = vpop.f32.mrf.mxu0
        %v820 = vadd.f32 %v667, %v819
        %v821 = vpop.f32.mrf.mxu0
        %v822 = vpop.f32.mrf.mxu0
        %v823 = vpop.f32.mrf.mxu0
        %824 = vdwg.mxu0
        %v825 = vsel %vm715, %v820, -inf
        %826 = vmax.xlane.f32.xlu0 %v825
        %v827 = vpop.xlane.xlu0 %826
        %v828 = vsub.f32 %v820, %v827
        %v829 = vmul.f32 %v828, 1.442695
        %v830 = vpow.pop %v829
        %v831 = vsel %vm715, %v830, 0.0
        %832 = vadd.xlane.f32.xlu0 %v831
        %v833 = vpop.xlane.xlu0 %832
        %v834 = vrcp.pop %v833
        %v835 = vmul.f32 1.0, %v834
        %v836 = vmul.f32 %v830, %v835
        %v837 = vpack.c.bf16 %v836, %v836
        %v839 = vsel %vm715, %v837, 0
        %841 = vmatprep.subr.bf16.mxu0 0
        %842 = vmatpush1.bf16.msra.mxu0 0
        %843 = vmatprep.subr.bf16.mxu0 0
        %844 = vmatpush1.bf16.msra.mxu0 0
        %845 = vmatprep.subr.bf16.mxu0 0
        %846 = vmatpush1.bf16.msra.mxu0 0
        %847 = vmatprep.subr.bf16.mxu0 0
        %848 = vmatpush1.bf16.msra.mxu0 0
        %849 = vmatprep.subr.bf16.mxu0 0
        %850 = vmatpush1.bf16.msra.mxu0 0
        %851 = vmatprep.subr.bf16.mxu0 0
        %852 = vmatpush1.bf16.msra.mxu0 0
        %853 = vmatprep.subr.bf16.mxu0 0
        %854 = vmatpush1.bf16.msra.mxu0 0
        %855 = vmatprep.subr.bf16.mxu0 0
        %856 = vmatpush1.bf16.msra.mxu0 %v737
        %857 = vmatprep.subr.bf16.mxu0 0
        %858 = vmatpush2.bf16.msra.mxu0 0
        %859 = vmatprep.subr.bf16.mxu0 0
        %860 = vmatpush2.bf16.msra.mxu0 0
        %861 = vmatprep.subr.bf16.mxu0 0
        %862 = vmatpush2.bf16.msra.mxu0 0
        %863 = vmatprep.subr.bf16.mxu0 0
        %864 = vmatpush2.bf16.msra.mxu0 0
        %865 = vmatprep.subr.bf16.mxu0 0
        %866 = vmatpush2.bf16.msra.mxu0 0
        %867 = vmatprep.subr.bf16.mxu0 0
        %868 = vmatpush2.bf16.msra.mxu0 0
        %869 = vmatprep.subr.bf16.mxu0 0
        %870 = vmatpush2.bf16.msra.mxu0 0
        %871 = vmatprep.subr.bf16.mxu0 0
        %872 = vmatpush2.bf16.msra.mxu0 0
        %873 = vmatprep.mubr.bf16.mxu0 0
        %874 = vmatmul.mubr.bf16.gmra.mxu0 %v839
        %v875 = vpop.f32.mrf.mxu0
        %v876 = vadd.f32 0.0, %v875
        %v877 = vpop.f32.mrf.mxu0
        %v878 = vpop.f32.mrf.mxu0
        %v879 = vpop.f32.mrf.mxu0
        %880 = vdwg.mxu0
        %881 = vrot.lane.b32.xlu0 %v659, 64
        %v882 = vpop.permute.xlu0 %881
        %884 = vrot.lane.b32.xlu0 %v660, 96
        %v885 = vpop.permute.xlu0 %884
        %v887 = vsel %vm668, %v882, 0
        %v890 = vsel %vm668, %v885, 0
        %892 = vmatprep.subr.bf16.mxu0 0
        %893 = vmatpush1.bf16.xpose.msra.mxu0 0
        %894 = vmatprep.subr.bf16.mxu0 0
        %895 = vmatpush1.bf16.xpose.msra.mxu0 0
        %896 = vmatprep.subr.bf16.mxu0 0
        %897 = vmatpush1.bf16.xpose.msra.mxu0 0
        %898 = vmatprep.subr.bf16.mxu0 0
        %899 = vmatpush1.bf16.xpose.msra.mxu0 0
        %900 = vmatprep.subr.bf16.mxu0 0
        %901 = vmatpush1.bf16.xpose.msra.mxu0 0
        %902 = vmatprep.subr.bf16.mxu0 0
        %903 = vmatpush1.bf16.xpose.msra.mxu0 0
        %904 = vmatprep.subr.bf16.mxu0 0
        %905 = vmatpush1.bf16.xpose.msra.mxu0 0
        %906 = vmatprep.subr.bf16.mxu0 0
        %907 = vmatpush1.bf16.xpose.msra.mxu0 %v890
        %908 = vmatprep.subr.bf16.mxu0 0
        %909 = vmatpush2.bf16.xpose.msra.mxu0 0
        %910 = vmatprep.subr.bf16.mxu0 0
        %911 = vmatpush2.bf16.xpose.msra.mxu0 0
        %912 = vmatprep.subr.bf16.mxu0 0
        %913 = vmatpush2.bf16.xpose.msra.mxu0 0
        %914 = vmatprep.subr.bf16.mxu0 0
        %915 = vmatpush2.bf16.xpose.msra.mxu0 0
        %916 = vmatprep.subr.bf16.mxu0 0
        %917 = vmatpush2.bf16.xpose.msra.mxu0 0
        %918 = vmatprep.subr.bf16.mxu0 0
        %919 = vmatpush2.bf16.xpose.msra.mxu0 0
        %920 = vmatprep.subr.bf16.mxu0 0
        %921 = vmatpush2.bf16.xpose.msra.mxu0 0
        %922 = vmatprep.subr.bf16.mxu0 0
        %923 = vmatpush2.bf16.xpose.msra.mxu0 0
        %924 = vmatprep.mubr.bf16.mxu0 0
        %925 = vmatmul.mubr.bf16.gmra.mxu0 %v887
        %v926 = vpop.f32.mrf.mxu0
        %v927 = vadd.f32 %v667, %v926
        %v928 = vpop.f32.mrf.mxu0
        %v929 = vpop.f32.mrf.mxu0
        %v930 = vpop.f32.mrf.mxu0
        %931 = vdwg.mxu0
        %v932 = vsel %vm715, %v927, -inf
        %933 = vmax.xlane.f32.xlu0 %v932
        %v934 = vpop.xlane.xlu0 %933
        %v935 = vsub.f32 %v927, %v934
        %v936 = vmul.f32 %v935, 1.442695
        %v937 = vpow.pop %v936
        %v938 = vsel %vm715, %v937, 0.0
        %939 = vadd.xlane.f32.xlu0 %v938
        %v940 = vpop.xlane.xlu0 %939
        %v941 = vrcp.pop %v940
        %v942 = vmul.f32 1.0, %v941
        %v943 = vmul.f32 %v937, %v942
        %v944 = vpack.c.bf16 %v943, %v943
        %945 = vrot.lane.b32.xlu0 %v661, 32
        %v946 = vpop.permute.xlu0 %945
        %v948 = vsel %vm715, %v944, 0
        %v951 = vsel %vm735, %v946, 0
        %953 = vmatprep.subr.bf16.mxu0 0
        %954 = vmatpush1.bf16.msra.mxu0 0
        %955 = vmatprep.subr.bf16.mxu0 0
        %956 = vmatpush1.bf16.msra.mxu0 0
        %957 = vmatprep.subr.bf16.mxu0 0
        %958 = vmatpush1.bf16.msra.mxu0 0
        %959 = vmatprep.subr.bf16.mxu0 0
        %960 = vmatpush1.bf16.msra.mxu0 0
        %961 = vmatprep.subr.bf16.mxu0 0
        %962 = vmatpush1.bf16.msra.mxu0 0
        %963 = vmatprep.subr.bf16.mxu0 0
        %964 = vmatpush1.bf16.msra.mxu0 0
        %965 = vmatprep.subr.bf16.mxu0 0
        %966 = vmatpush1.bf16.msra.mxu0 0
        %967 = vmatprep.subr.bf16.mxu0 0
        %968 = vmatpush1.bf16.msra.mxu0 %v951
        %969 = vmatprep.subr.bf16.mxu0 0
        %970 = vmatpush2.bf16.msra.mxu0 0
        %971 = vmatprep.subr.bf16.mxu0 0
        %972 = vmatpush2.bf16.msra.mxu0 0
        %973 = vmatprep.subr.bf16.mxu0 0
        %974 = vmatpush2.bf16.msra.mxu0 0
        %975 = vmatprep.subr.bf16.mxu0 0
        %976 = vmatpush2.bf16.msra.mxu0 0
        %977 = vmatprep.subr.bf16.mxu0 0
        %978 = vmatpush2.bf16.msra.mxu0 0
        %979 = vmatprep.subr.bf16.mxu0 0
        %980 = vmatpush2.bf16.msra.mxu0 0
        %981 = vmatprep.subr.bf16.mxu0 0
        %982 = vmatpush2.bf16.msra.mxu0 0
        %983 = vmatprep.subr.bf16.mxu0 0
        %984 = vmatpush2.bf16.msra.mxu0 0
        %985 = vmatprep.mubr.bf16.mxu0 0
        %986 = vmatmul.mubr.bf16.gmra.mxu0 %v948
        %v987 = vpop.f32.mrf.mxu0
        %v988 = vadd.f32 0.0, %v987
        %v989 = vpop.f32.mrf.mxu0
        %v990 = vpop.f32.mrf.mxu0
        %v991 = vpop.f32.mrf.mxu0
        %992 = vdwg.mxu0
        %993 = vrot.lane.b32.xlu0 %v659, 32
        %v994 = vpop.permute.xlu0 %993
        %v996 = vsel %vm668, %v994, 0
        %998 = vmatprep.subr.bf16.mxu0 0
        %999 = vmatpush1.bf16.xpose.msra.mxu0 0
        %1000 = vmatprep.subr.bf16.mxu0 0
        %1001 = vmatpush1.bf16.xpose.msra.mxu0 0
        %1002 = vmatprep.subr.bf16.mxu0 0
        %1003 = vmatpush1.bf16.xpose.msra.mxu0 0
        %1004 = vmatprep.subr.bf16.mxu0 0
        %1005 = vmatpush1.bf16.xpose.msra.mxu0 0
        %1006 = vmatprep.subr.bf16.mxu0 0
        %1007 = vmatpush1.bf16.xpose.msra.mxu0 0
        %1008 = vmatprep.subr.bf16.mxu0 0
        %1009 = vmatpush1.bf16.xpose.msra.mxu0 0
        %1010 = vmatprep.subr.bf16.mxu0 0
        %1011 = vmatpush1.bf16.xpose.msra.mxu0 0
        %1012 = vmatprep.subr.bf16.mxu0 0
        %1013 = vmatpush1.bf16.xpose.msra.mxu0 %v890
        %1014 = vmatprep.subr.bf16.mxu0 0
        %1015 = vmatpush2.bf16.xpose.msra.mxu0 0
        %1016 = vmatprep.subr.bf16.mxu0 0
        %1017 = vmatpush2.bf16.xpose.msra.mxu0 0
        %1018 = vmatprep.subr.bf16.mxu0 0
        %1019 = vmatpush2.bf16.xpose.msra.mxu0 0
        %1020 = vmatprep.subr.bf16.mxu0 0
        %1021 = vmatpush2.bf16.xpose.msra.mxu0 0
        %1022 = vmatprep.subr.bf16.mxu0 0
        %1023 = vmatpush2.bf16.xpose.msra.mxu0 0
        %1024 = vmatprep.subr.bf16.mxu0 0
        %1025 = vmatpush2.bf16.xpose.msra.mxu0 0
        %1026 = vmatprep.subr.bf16.mxu0 0
        %1027 = vmatpush2.bf16.xpose.msra.mxu0 0
        %1028 = vmatprep.subr.bf16.mxu0 0
        %1029 = vmatpush2.bf16.xpose.msra.mxu0 0
        %1030 = vmatprep.mubr.bf16.mxu0 0
        %1031 = vmatmul.mubr.bf16.gmra.mxu0 %v996
        %v1032 = vpop.f32.mrf.mxu0
        %v1033 = vadd.f32 %v667, %v1032
        %v1034 = vpop.f32.mrf.mxu0
        %v1035 = vpop.f32.mrf.mxu0
        %v1036 = vpop.f32.mrf.mxu0
        %1037 = vdwg.mxu0
        %v1038 = vsel %vm715, %v1033, -inf
        %1039 = vmax.xlane.f32.xlu0 %v1038
        %v1040 = vpop.xlane.xlu0 %1039
        %v1041 = vsub.f32 %v1033, %v1040
        %v1042 = vmul.f32 %v1041, 1.442695
        %v1043 = vpow.pop %v1042
        %v1044 = vsel %vm715, %v1043, 0.0
        %1045 = vadd.xlane.f32.xlu0 %v1044
        %v1046 = vpop.xlane.xlu0 %1045
        %v1047 = vrcp.pop %v1046
        %v1048 = vmul.f32 1.0, %v1047
        %v1049 = vmul.f32 %v1043, %v1048
        %v1050 = vpack.c.bf16 %v1049, %v1049
        %v1052 = vsel %vm715, %v1050, 0
        %1054 = vmatprep.subr.bf16.mxu0 0
        %1055 = vmatpush1.bf16.msra.mxu0 0
        %1056 = vmatprep.subr.bf16.mxu0 0
        %1057 = vmatpush1.bf16.msra.mxu0 0
        %1058 = vmatprep.subr.bf16.mxu0 0
        %1059 = vmatpush1.bf16.msra.mxu0 0
        %1060 = vmatprep.subr.bf16.mxu0 0
        %1061 = vmatpush1.bf16.msra.mxu0 0
        %1062 = vmatprep.subr.bf16.mxu0 0
        %1063 = vmatpush1.bf16.msra.mxu0 0
        %1064 = vmatprep.subr.bf16.mxu0 0
        %1065 = vmatpush1.bf16.msra.mxu0 0
        %1066 = vmatprep.subr.bf16.mxu0 0
        %1067 = vmatpush1.bf16.msra.mxu0 0
        %1068 = vmatprep.subr.bf16.mxu0 0
        %1069 = vmatpush1.bf16.msra.mxu0 %v951
        %1070 = vmatprep.subr.bf16.mxu0 0
        %1071 = vmatpush2.bf16.msra.mxu0 0
        %1072 = vmatprep.subr.bf16.mxu0 0
        %1073 = vmatpush2.bf16.msra.mxu0 0
        %1074 = vmatprep.subr.bf16.mxu0 0
        %1075 = vmatpush2.bf16.msra.mxu0 0
        %1076 = vmatprep.subr.bf16.mxu0 0
        %1077 = vmatpush2.bf16.msra.mxu0 0
        %1078 = vmatprep.subr.bf16.mxu0 0
        %1079 = vmatpush2.bf16.msra.mxu0 0
        %1080 = vmatprep.subr.bf16.mxu0 0
        %1081 = vmatpush2.bf16.msra.mxu0 0
        %1082 = vmatprep.subr.bf16.mxu0 0
        %1083 = vmatpush2.bf16.msra.mxu0 0
        %1084 = vmatprep.subr.bf16.mxu0 0
        %1085 = vmatpush2.bf16.msra.mxu0 0
        %1086 = vmatprep.mubr.bf16.mxu0 0
        %1087 = vmatmul.mubr.bf16.gmra.mxu0 %v1052
        %v1088 = vpop.f32.mrf.mxu0
        %v1089 = vadd.f32 0.0, %v1088
        %v1090 = vpop.f32.mrf.mxu0
        %v1091 = vpop.f32.mrf.mxu0
        %v1092 = vpop.f32.mrf.mxu0
        %1093 = vdwg.mxu0
        %1095 = vrot.lane.b32.xlu0 %v876, 32
        %v1096 = vpop.permute.xlu0 %1095
        %1099 = vrot.lane.b32.xlu0 %v988, 64
        %v1100 = vpop.permute.xlu0 %1099
        %1103 = vrot.lane.b32.xlu0 %v1089, 96
        %v1104 = vpop.permute.xlu0 %1103
        %v1106 = vsel %vm668, %v774, %v1096
        %vm1107 = vcmask 523264
        %v1108 = vsel %vm1107, %v1106, %v1100
        %vm1109 = vcmask 785408
        %v1110 = vsel %vm1109, %v1108, %v1104
        %v1111 = vpack.c.bf16 %v1110, %v1110
        %v1112 = vld [vmem:[%s2] sm:$0xf]
        %v1113 = vld [vmem:[%s2 + $0x4] sm:$0xf]
        %v1114 = vld [vmem:[%s2 + $0x8] sm:$0xf]
        %v1115 = vld [vmem:[%s2 + $0xc] sm:$0xf]
        %v1116 = vld [vmem:[%s2 + $0x10] sm:$0xf]
        %v1117 = vld [vmem:[%s2 + $0x14] sm:$0xf]
        %v1118 = vld [vmem:[%s2 + $0x18] sm:$0xf]
        %v1119 = vld [vmem:[%s2 + $0x1c] sm:$0xf]
        %v1120 = vld [vmem:[%s2 + $0x20] sm:$0xf]
        %v1121 = vld [vmem:[%s2 + $0x24] sm:$0xf]
        %v1122 = vld [vmem:[%s2 + $0x28] sm:$0xf]
        %v1123 = vld [vmem:[%s2 + $0x2c] sm:$0xf]
        %v1124 = vld [vmem:[%s2 + $0x30] sm:$0xf]
        %v1125 = vld [vmem:[%s2 + $0x34] sm:$0xf]
        %v1126 = vld [vmem:[%s2 + $0x38] sm:$0xf]
        %v1127 = vld [vmem:[%s2 + $0x3c] sm:$0xf]
        %v1144 = vunpack.c.l.b16 %v1112
        %v1145 = vunpack.c.l.b16 %v1113
        %v1146 = vunpack.c.l.b16 %v1114
        %v1147 = vunpack.c.l.b16 %v1115
        %v1148 = vunpack.c.l.b16 %v1116
        %v1149 = vunpack.c.l.b16 %v1117
        %v1150 = vunpack.c.l.b16 %v1118
        %v1151 = vunpack.c.l.b16 %v1119
        %v1152 = vunpack.c.l.b16 %v1120
        %v1153 = vunpack.c.l.b16 %v1121
        %v1154 = vunpack.c.l.b16 %v1122
        %v1155 = vunpack.c.l.b16 %v1123
        %v1156 = vunpack.c.l.b16 %v1124
        %v1157 = vunpack.c.l.b16 %v1125
        %v1158 = vunpack.c.l.b16 %v1126
        %v1159 = vunpack.c.l.b16 %v1127
        %v1160 = vpack.c.b16 %v1145, %v1144
        %v1161 = vpack.c.b16 %v1147, %v1146
        %v1162 = vpack.c.b16 %v1149, %v1148
        %v1163 = vpack.c.b16 %v1151, %v1150
        %v1164 = vpack.c.b16 %v1153, %v1152
        %v1165 = vpack.c.b16 %v1155, %v1154
        %v1166 = vpack.c.b16 %v1157, %v1156
        %v1167 = vpack.c.b16 %v1159, %v1158
        %1176 = vmatprep.subr.bf16.mxu0 0
        %1177 = vmatpush1.bf16.msra.mxu0 %v1167
        %1178 = vmatprep.subr.bf16.mxu0 0
        %1179 = vmatpush1.bf16.msra.mxu0 %v1166
        %1180 = vmatprep.subr.bf16.mxu0 0
        %1181 = vmatpush1.bf16.msra.mxu0 %v1165
        %1182 = vmatprep.subr.bf16.mxu0 0
        %1183 = vmatpush1.bf16.msra.mxu0 %v1164
        %1184 = vmatprep.subr.bf16.mxu0 0
        %1185 = vmatpush1.bf16.msra.mxu0 %v1163
        %1186 = vmatprep.subr.bf16.mxu0 0
        %1187 = vmatpush1.bf16.msra.mxu0 %v1162
        %1188 = vmatprep.subr.bf16.mxu0 0
        %1189 = vmatpush1.bf16.msra.mxu0 %v1161
        %1190 = vmatprep.subr.bf16.mxu0 0
        %1191 = vmatpush1.bf16.msra.mxu0 %v1160
        %1192 = vmatprep.subr.bf16.mxu0 0
        %1193 = vmatpush2.bf16.msra.mxu0 0
        %1194 = vmatprep.subr.bf16.mxu0 0
        %1195 = vmatpush2.bf16.msra.mxu0 0
        %1196 = vmatprep.subr.bf16.mxu0 0
        %1197 = vmatpush2.bf16.msra.mxu0 0
        %1198 = vmatprep.subr.bf16.mxu0 0
        %1199 = vmatpush2.bf16.msra.mxu0 0
        %1200 = vmatprep.subr.bf16.mxu0 0
        %1201 = vmatpush2.bf16.msra.mxu0 0
        %1202 = vmatprep.subr.bf16.mxu0 0
        %1203 = vmatpush2.bf16.msra.mxu0 0
        %1204 = vmatprep.subr.bf16.mxu0 0
        %1205 = vmatpush2.bf16.msra.mxu0 0
        %1206 = vmatprep.subr.bf16.mxu0 0
        %1207 = vmatpush2.bf16.msra.mxu0 0
        %1208 = vmatprep.mubr.bf16.mxu0 0
        %1209 = vmatmul.mubr.bf16.gmra.mxu0 %v1111
        %v1210 = vpop.f32.mrf.mxu0
        %v1211 = vadd.f32 0.0, %v1210
        %v1212 = vpop.f32.mrf.mxu0
        %v1213 = vpop.f32.mrf.mxu0
        %v1214 = vpop.f32.mrf.mxu0
        %1215 = vdwg.mxu0
        %v1216 = vadd.f32 %v357, %v1211
        %v1217 = vld [vmem:[%s6] sm:$0x1]
        %v1218 = vmul.f32 %v1216, %v1216
        %1219 = vadd.xlane.f32.xlu0 %v1218
        %v1220 = vpop.xlane.xlu0 %1219
        %v1221 = vmul.f32 %v1220, %v362
        %v1222 = vadd.f32 %v1221, 1e-05
        %v1223 = vrsqrt.pop %v1222
        %v1224 = vmul.f32 %v1216, %v1223
        %v1226 = vlaneseq
        %v1227 = vshrl.u32 %v1226, 7
        %v1228 = vsub.s32 0, %v1227
        %v1229 = vrot.slane %v1217, %v1228
        %v1231 = vmul.f32 %v1229, %v1224
        %v1232 = vpack.c.bf16 %v1231, %v1231
        %v1233 = vld [vmem:[%s3] sm:$0xff]
        %v1234 = vld [vmem:[%s3 + $0x8] sm:$0xff]
        %v1235 = vld [vmem:[%s3 + $0x10] sm:$0xff]
        %v1236 = vld [vmem:[%s3 + $0x18] sm:$0xff]
        %v1237 = vld [vmem:[%s3 + $0x20] sm:$0xff]
        %v1238 = vld [vmem:[%s3 + $0x28] sm:$0xff]
        %v1239 = vld [vmem:[%s3 + $0x30] sm:$0xff]
        %v1240 = vld [vmem:[%s3 + $0x38] sm:$0xff]
        %v1241 = vld [vmem:[%s3 + $0x40] sm:$0xff]
        %v1242 = vld [vmem:[%s3 + $0x48] sm:$0xff]
        %v1243 = vld [vmem:[%s3 + $0x50] sm:$0xff]
        %v1244 = vld [vmem:[%s3 + $0x58] sm:$0xff]
        %v1245 = vld [vmem:[%s3 + $0x60] sm:$0xff]
        %v1246 = vld [vmem:[%s3 + $0x68] sm:$0xff]
        %v1247 = vld [vmem:[%s3 + $0x70] sm:$0xff]
        %v1248 = vld [vmem:[%s3 + $0x78] sm:$0xff]
        %v1249 = vld [vmem:[%s3 + $0x80] sm:$0xff]
        %v1250 = vld [vmem:[%s3 + $0x88] sm:$0xff]
        %v1251 = vld [vmem:[%s3 + $0x90] sm:$0xff]
        %v1252 = vld [vmem:[%s3 + $0x98] sm:$0xff]
        %v1253 = vld [vmem:[%s3 + $0xa0] sm:$0xff]
        %v1254 = vld [vmem:[%s3 + $0xa8] sm:$0xff]
        %v1255 = vld [vmem:[%s3 + $0xb0] sm:$0xff]
        %v1256 = vld [vmem:[%s3 + $0xb8] sm:$0xff]
        %v1257 = vld [vmem:[%s3 + $0xc0] sm:$0xff]
        %v1258 = vld [vmem:[%s3 + $0xc8] sm:$0xff]
        %v1259 = vld [vmem:[%s3 + $0xd0] sm:$0xff]
        %v1260 = vld [vmem:[%s3 + $0xd8] sm:$0xff]
        %v1261 = vld [vmem:[%s3 + $0xe0] sm:$0xff]
        %v1262 = vld [vmem:[%s3 + $0xe8] sm:$0xff]
        %v1263 = vld [vmem:[%s3 + $0xf0] sm:$0xff]
        %v1264 = vld [vmem:[%s3 + $0xf8] sm:$0xff]
        %v1265 = vld [vmem:[%s3 + $0x100] sm:$0xff]
        %v1266 = vld [vmem:[%s3 + $0x108] sm:$0xff]
        %v1267 = vld [vmem:[%s3 + $0x110] sm:$0xff]
        %v1268 = vld [vmem:[%s3 + $0x118] sm:$0xff]
        %v1269 = vld [vmem:[%s3 + $0x120] sm:$0xff]
        %v1270 = vld [vmem:[%s3 + $0x128] sm:$0xff]
        %v1271 = vld [vmem:[%s3 + $0x130] sm:$0xff]
        %v1272 = vld [vmem:[%s3 + $0x138] sm:$0xff]
        %v1273 = vld [vmem:[%s3 + $0x140] sm:$0xff]
        %v1274 = vld [vmem:[%s3 + $0x148] sm:$0xff]
        %v1275 = vld [vmem:[%s3 + $0x150] sm:$0xff]
        %v1276 = vld [vmem:[%s3 + $0x158] sm:$0xff]
        %v1277 = vld [vmem:[%s3 + $0x160] sm:$0xff]
        %v1278 = vld [vmem:[%s3 + $0x168] sm:$0xff]
        %v1279 = vld [vmem:[%s3 + $0x170] sm:$0xff]
        %v1280 = vld [vmem:[%s3 + $0x178] sm:$0xff]
        %v1329 = vunpack.c.l.b16 %v1233
        %v1330 = vunpack.c.h.b16 %v1233
        %v1331 = vunpack.c.l.b16 %v1234
        %v1332 = vunpack.c.h.b16 %v1234
        %v1333 = vunpack.c.l.b16 %v1235
        %v1334 = vunpack.c.h.b16 %v1235
        %v1335 = vunpack.c.l.b16 %v1236
        %v1336 = vunpack.c.h.b16 %v1236
        %v1337 = vunpack.c.l.b16 %v1237
        %v1338 = vunpack.c.h.b16 %v1237
        %v1339 = vunpack.c.l.b16 %v1238
        %v1340 = vunpack.c.h.b16 %v1238
        %v1341 = vunpack.c.l.b16 %v1239
        %v1342 = vunpack.c.h.b16 %v1239
        %v1343 = vunpack.c.l.b16 %v1240
        %v1344 = vunpack.c.h.b16 %v1240
        %v1345 = vunpack.c.l.b16 %v1241
        %v1346 = vunpack.c.h.b16 %v1241
        %v1347 = vunpack.c.l.b16 %v1242
        %v1348 = vunpack.c.h.b16 %v1242
        %v1349 = vunpack.c.l.b16 %v1243
        %v1350 = vunpack.c.h.b16 %v1243
        %v1351 = vunpack.c.l.b16 %v1244
        %v1352 = vunpack.c.h.b16 %v1244
        %v1353 = vunpack.c.l.b16 %v1245
        %v1354 = vunpack.c.h.b16 %v1245
        %v1355 = vunpack.c.l.b16 %v1246
        %v1356 = vunpack.c.h.b16 %v1246
        %v1357 = vunpack.c.l.b16 %v1247
        %v1358 = vunpack.c.h.b16 %v1247
        %v1359 = vunpack.c.l.b16 %v1248
        %v1360 = vunpack.c.h.b16 %v1248
        %v1361 = vunpack.c.l.b16 %v1249
        %v1362 = vunpack.c.h.b16 %v1249
        %v1363 = vunpack.c.l.b16 %v1250
        %v1364 = vunpack.c.h.b16 %v1250
        %v1365 = vunpack.c.l.b16 %v1251
        %v1366 = vunpack.c.h.b16 %v1251
        %v1367 = vunpack.c.l.b16 %v1252
        %v1368 = vunpack.c.h.b16 %v1252
        %v1369 = vunpack.c.l.b16 %v1253
        %v1370 = vunpack.c.h.b16 %v1253
        %v1371 = vunpack.c.l.b16 %v1254
        %v1372 = vunpack.c.h.b16 %v1254
        %v1373 = vunpack.c.l.b16 %v1255
        %v1374 = vunpack.c.h.b16 %v1255
        %v1375 = vunpack.c.l.b16 %v1256
        %v1376 = vunpack.c.h.b16 %v1256
        %v1377 = vunpack.c.l.b16 %v1257
        %v1378 = vunpack.c.h.b16 %v1257
        %v1379 = vunpack.c.l.b16 %v1258
        %v1380 = vunpack.c.h.b16 %v1258
        %v1381 = vunpack.c.l.b16 %v1259
        %v1382 = vunpack.c.h.b16 %v1259
        %v1383 = vunpack.c.l.b16 %v1260
        %v1384 = vunpack.c.h.b16 %v1260
        %v1385 = vunpack.c.l.b16 %v1261
        %v1386 = vunpack.c.h.b16 %v1261
        %v1387 = vunpack.c.l.b16 %v1262
        %v1388 = vunpack.c.h.b16 %v1262
        %v1389 = vunpack.c.l.b16 %v1263
        %v1390 = vunpack.c.h.b16 %v1263
        %v1391 = vunpack.c.l.b16 %v1264
        %v1392 = vunpack.c.h.b16 %v1264
        %v1393 = vunpack.c.l.b16 %v1265
        %v1394 = vunpack.c.h.b16 %v1265
        %v1395 = vunpack.c.l.b16 %v1266
        %v1396 = vunpack.c.h.b16 %v1266
        %v1397 = vunpack.c.l.b16 %v1267
        %v1398 = vunpack.c.h.b16 %v1267
        %v1399 = vunpack.c.l.b16 %v1268
        %v1400 = vunpack.c.h.b16 %v1268
        %v1401 = vunpack.c.l.b16 %v1269
        %v1402 = vunpack.c.h.b16 %v1269
        %v1403 = vunpack.c.l.b16 %v1270
        %v1404 = vunpack.c.h.b16 %v1270
        %v1405 = vunpack.c.l.b16 %v1271
        %v1406 = vunpack.c.h.b16 %v1271
        %v1407 = vunpack.c.l.b16 %v1272
        %v1408 = vunpack.c.h.b16 %v1272
        %v1409 = vunpack.c.l.b16 %v1273
        %v1410 = vunpack.c.h.b16 %v1273
        %v1411 = vunpack.c.l.b16 %v1274
        %v1412 = vunpack.c.h.b16 %v1274
        %v1413 = vunpack.c.l.b16 %v1275
        %v1414 = vunpack.c.h.b16 %v1275
        %v1415 = vunpack.c.l.b16 %v1276
        %v1416 = vunpack.c.h.b16 %v1276
        %v1417 = vunpack.c.l.b16 %v1277
        %v1418 = vunpack.c.h.b16 %v1277
        %v1419 = vunpack.c.l.b16 %v1278
        %v1420 = vunpack.c.h.b16 %v1278
        %v1421 = vunpack.c.l.b16 %v1279
        %v1422 = vunpack.c.h.b16 %v1279
        %v1423 = vunpack.c.l.b16 %v1280
        %v1424 = vunpack.c.h.b16 %v1280
        %v1425 = vpack.c.b16 %v1335, %v1329
        %v1426 = vpack.c.b16 %v1336, %v1330
        %v1427 = vpack.c.b16 %v1337, %v1331
        %v1428 = vpack.c.b16 %v1338, %v1332
        %v1429 = vpack.c.b16 %v1339, %v1333
        %v1430 = vpack.c.b16 %v1340, %v1334
        %v1431 = vpack.c.b16 %v1347, %v1341
        %v1432 = vpack.c.b16 %v1348, %v1342
        %v1433 = vpack.c.b16 %v1349, %v1343
        %v1434 = vpack.c.b16 %v1350, %v1344
        %v1435 = vpack.c.b16 %v1351, %v1345
        %v1436 = vpack.c.b16 %v1352, %v1346
        %v1437 = vpack.c.b16 %v1359, %v1353
        %v1438 = vpack.c.b16 %v1360, %v1354
        %v1439 = vpack.c.b16 %v1361, %v1355
        %v1440 = vpack.c.b16 %v1362, %v1356
        %v1441 = vpack.c.b16 %v1363, %v1357
        %v1442 = vpack.c.b16 %v1364, %v1358
        %v1443 = vpack.c.b16 %v1371, %v1365
        %v1444 = vpack.c.b16 %v1372, %v1366
        %v1445 = vpack.c.b16 %v1373, %v1367
        %v1446 = vpack.c.b16 %v1374, %v1368
        %v1447 = vpack.c.b16 %v1375, %v1369
        %v1448 = vpack.c.b16 %v1376, %v1370
        %v1449 = vpack.c.b16 %v1383, %v1377
        %v1450 = vpack.c.b16 %v1384, %v1378
        %v1451 = vpack.c.b16 %v1385, %v1379
        %v1452 = vpack.c.b16 %v1386, %v1380
        %v1453 = vpack.c.b16 %v1387, %v1381
        %v1454 = vpack.c.b16 %v1388, %v1382
        %v1455 = vpack.c.b16 %v1395, %v1389
        %v1456 = vpack.c.b16 %v1396, %v1390
        %v1457 = vpack.c.b16 %v1397, %v1391
        %v1458 = vpack.c.b16 %v1398, %v1392
        %v1459 = vpack.c.b16 %v1399, %v1393
        %v1460 = vpack.c.b16 %v1400, %v1394
        %v1461 = vpack.c.b16 %v1407, %v1401
        %v1462 = vpack.c.b16 %v1408, %v1402
        %v1463 = vpack.c.b16 %v1409, %v1403
        %v1464 = vpack.c.b16 %v1410, %v1404
        %v1465 = vpack.c.b16 %v1411, %v1405
        %v1466 = vpack.c.b16 %v1412, %v1406
        %v1467 = vpack.c.b16 %v1419, %v1413
        %v1468 = vpack.c.b16 %v1420, %v1414
        %v1469 = vpack.c.b16 %v1421, %v1415
        %v1470 = vpack.c.b16 %v1422, %v1416
        %v1471 = vpack.c.b16 %v1423, %v1417
        %v1472 = vpack.c.b16 %v1424, %v1418
        %1521 = vmatprep.subr.bf16.mxu0 %v1468
        %1522 = vmatpush1.bf16.msra.mxu0 %v1467
        %1523 = vmatprep.subr.bf16.mxu0 %v1462
        %1524 = vmatpush1.bf16.msra.mxu0 %v1461
        %1525 = vmatprep.subr.bf16.mxu0 %v1456
        %1526 = vmatpush1.bf16.msra.mxu0 %v1455
        %1527 = vmatprep.subr.bf16.mxu0 %v1450
        %1528 = vmatpush1.bf16.msra.mxu0 %v1449
        %1529 = vmatprep.subr.bf16.mxu0 %v1444
        %1530 = vmatpush1.bf16.msra.mxu0 %v1443
        %1531 = vmatprep.subr.bf16.mxu0 %v1438
        %1532 = vmatpush1.bf16.msra.mxu0 %v1437
        %1533 = vmatprep.subr.bf16.mxu0 %v1432
        %1534 = vmatpush1.bf16.msra.mxu0 %v1431
        %1535 = vmatprep.subr.bf16.mxu0 %v1426
        %1536 = vmatpush1.bf16.msra.mxu0 %v1425
        %1537 = vmatprep.subr.bf16.mxu0 0
        %1538 = vmatpush2.bf16.msra.mxu0 0
        %1539 = vmatprep.subr.bf16.mxu0 0
        %1540 = vmatpush2.bf16.msra.mxu0 0
        %1541 = vmatprep.subr.bf16.mxu0 0
        %1542 = vmatpush2.bf16.msra.mxu0 0
        %1543 = vmatprep.subr.bf16.mxu0 0
        %1544 = vmatpush2.bf16.msra.mxu0 0
        %1545 = vmatprep.subr.bf16.mxu0 0
        %1546 = vmatpush2.bf16.msra.mxu0 0
        %1547 = vmatprep.subr.bf16.mxu0 0
        %1548 = vmatpush2.bf16.msra.mxu0 0
        %1549 = vmatprep.subr.bf16.mxu0 0
        %1550 = vmatpush2.bf16.msra.mxu0 0
        %1551 = vmatprep.subr.bf16.mxu0 0
        %1552 = vmatpush2.bf16.msra.mxu0 0
        %1553 = vmatprep.mubr.bf16.mxu0 0
        %1554 = vmatmul.mubr.bf16.gmra.mxu0 %v1232
        %v1555 = vpop.f32.mrf.mxu0
        %v1556 = vadd.f32 0.0, %v1555
        %v1557 = vpop.f32.mrf.mxu0
        %v1558 = vadd.f32 0.0, %v1557
        %v1559 = vpop.f32.mrf.mxu0
        %v1560 = vpop.f32.mrf.mxu0
        %1561 = vdwg.mxu0
        %1562 = vmatprep.subr.bf16.mxu0 %v1470
        %1563 = vmatpush1.bf16.msra.mxu0 %v1469
        %1564 = vmatprep.subr.bf16.mxu0 %v1464
        %1565 = vmatpush1.bf16.msra.mxu0 %v1463
        %1566 = vmatprep.subr.bf16.mxu0 %v1458
        %1567 = vmatpush1.bf16.msra.mxu0 %v1457
        %1568 = vmatprep.subr.bf16.mxu0 %v1452
        %1569 = vmatpush1.bf16.msra.mxu0 %v1451
        %1570 = vmatprep.subr.bf16.mxu0 %v1446
        %1571 = vmatpush1.bf16.msra.mxu0 %v1445
        %1572 = vmatprep.subr.bf16.mxu0 %v1440
        %1573 = vmatpush1.bf16.msra.mxu0 %v1439
        %1574 = vmatprep.subr.bf16.mxu0 %v1434
        %1575 = vmatpush1.bf16.msra.mxu0 %v1433
        %1576 = vmatprep.subr.bf16.mxu0 %v1428
        %1577 = vmatpush1.bf16.msra.mxu0 %v1427
        %1578 = vmatprep.subr.bf16.mxu0 0
        %1579 = vmatpush2.bf16.msra.mxu0 0
        %1580 = vmatprep.subr.bf16.mxu0 0
        %1581 = vmatpush2.bf16.msra.mxu0 0
        %1582 = vmatprep.subr.bf16.mxu0 0
        %1583 = vmatpush2.bf16.msra.mxu0 0
        %1584 = vmatprep.subr.bf16.mxu0 0
        %1585 = vmatpush2.bf16.msra.mxu0 0
        %1586 = vmatprep.subr.bf16.mxu0 0
        %1587 = vmatpush2.bf16.msra.mxu0 0
        %1588 = vmatprep.subr.bf16.mxu0 0
        %1589 = vmatpush2.bf16.msra.mxu0 0
        %1590 = vmatprep.subr.bf16.mxu0 0
        %1591 = vmatpush2.bf16.msra.mxu0 0
        %1592 = vmatprep.subr.bf16.mxu0 0
        %1593 = vmatpush2.bf16.msra.mxu0 0
        %1594 = vmatprep.mubr.bf16.mxu0 0
        %1595 = vmatmul.mubr.bf16.gmra.mxu0 %v1232
        %v1596 = vpop.f32.mrf.mxu0
        %v1597 = vadd.f32 0.0, %v1596
        %v1598 = vpop.f32.mrf.mxu0
        %v1599 = vadd.f32 0.0, %v1598
        %v1600 = vpop.f32.mrf.mxu0
        %v1601 = vpop.f32.mrf.mxu0
        %1602 = vdwg.mxu0
        %1603 = vmatprep.subr.bf16.mxu0 %v1472
        %1604 = vmatpush1.bf16.msra.mxu0 %v1471
        %1605 = vmatprep.subr.bf16.mxu0 %v1466
        %1606 = vmatpush1.bf16.msra.mxu0 %v1465
        %1607 = vmatprep.subr.bf16.mxu0 %v1460
        %1608 = vmatpush1.bf16.msra.mxu0 %v1459
        %1609 = vmatprep.subr.bf16.mxu0 %v1454
        %1610 = vmatpush1.bf16.msra.mxu0 %v1453
        %1611 = vmatprep.subr.bf16.mxu0 %v1448
        %1612 = vmatpush1.bf16.msra.mxu0 %v1447
        %1613 = vmatprep.subr.bf16.mxu0 %v1442
        %1614 = vmatpush1.bf16.msra.mxu0 %v1441
        %1615 = vmatprep.subr.bf16.mxu0 %v1436
        %1616 = vmatpush1.bf16.msra.mxu0 %v1435
        %1617 = vmatprep.subr.bf16.mxu0 %v1430
        %1618 = vmatpush1.bf16.msra.mxu0 %v1429
        %1619 = vmatprep.subr.bf16.mxu0 0
        %1620 = vmatpush2.bf16.msra.mxu0 0
        %1621 = vmatprep.subr.bf16.mxu0 0
        %1622 = vmatpush2.bf16.msra.mxu0 0
        %1623 = vmatprep.subr.bf16.mxu0 0
        %1624 = vmatpush2.bf16.msra.mxu0 0
        %1625 = vmatprep.subr.bf16.mxu0 0
        %1626 = vmatpush2.bf16.msra.mxu0 0
        %1627 = vmatprep.subr.bf16.mxu0 0
        %1628 = vmatpush2.bf16.msra.mxu0 0
        %1629 = vmatprep.subr.bf16.mxu0 0
        %1630 = vmatpush2.bf16.msra.mxu0 0
        %1631 = vmatprep.subr.bf16.mxu0 0
        %1632 = vmatpush2.bf16.msra.mxu0 0
        %1633 = vmatprep.subr.bf16.mxu0 0
        %1634 = vmatpush2.bf16.msra.mxu0 0
        %1635 = vmatprep.mubr.bf16.mxu0 0
        %1636 = vmatmul.mubr.bf16.gmra.mxu0 %v1232
        %v1637 = vpop.f32.mrf.mxu0
        %v1638 = vadd.f32 0.0, %v1637
        %v1639 = vpop.f32.mrf.mxu0
        %v1640 = vadd.f32 0.0, %v1639
        %v1641 = vpop.f32.mrf.mxu0
        %v1642 = vpop.f32.mrf.mxu0
        %1643 = vdwg.mxu0
        %v1644 = vsub.f32 0.0, %v1556
        %v1645 = vsub.f32 0.0, %v1558
        %v1646 = vsub.f32 0.0, %v1597
        %v1647 = vmul.f32 %v1644, 1.442695
        %v1648 = vpow.pop %v1647
        %v1649 = vmul.f32 %v1645, 1.442695
        %v1650 = vpow.pop %v1649
        %v1651 = vmul.f32 %v1646, 1.442695
        %v1652 = vpow.pop %v1651
        %v1653 = vadd.f32 %v1648, 1.0
        %v1654 = vadd.f32 %v1650, 1.0
        %v1655 = vadd.f32 %v1652, 1.0
        %v1656 = vrcp.pop %v1653
        %v1657 = vmul.f32 1.0, %v1656
        %v1658 = vrcp.pop %v1654
        %v1659 = vmul.f32 1.0, %v1658
        %v1660 = vrcp.pop %v1655
        %v1661 = vmul.f32 1.0, %v1660
        %v1662 = vmul.f32 %v1556, %v1657
        %v1663 = vmul.f32 %v1558, %v1659
        %v1664 = vmul.f32 %v1597, %v1661
        %v1665 = vmul.f32 %v1662, %v1599
        %v1666 = vmul.f32 %v1663, %v1638
        %v1667 = vmul.f32 %v1664, %v1640
        %v1668 = vpack.c.bf16 %v1665, %v1665
        %v1669 = vpack.c.bf16 %v1666, %v1666
        %v1670 = vpack.c.bf16 %v1667, %v1667
        %v1671 = vld [vmem:[#allocation2] sm:$0xf]
        %v1672 = vld [vmem:[#allocation2 + $0x4] sm:$0xf]
        %v1673 = vld [vmem:[#allocation2 + $0x8] sm:$0xf]
        %v1674 = vld [vmem:[#allocation2 + $0xc] sm:$0xf]
        %v1675 = vld [vmem:[#allocation2 + $0x10] sm:$0xf]
        %v1676 = vld [vmem:[#allocation2 + $0x14] sm:$0xf]
        %v1677 = vld [vmem:[#allocation2 + $0x18] sm:$0xf]
        %v1678 = vld [vmem:[#allocation2 + $0x1c] sm:$0xf]
        %v1679 = vld [vmem:[#allocation2 + $0x20] sm:$0xf]
        %v1680 = vld [vmem:[#allocation2 + $0x24] sm:$0xf]
        %v1681 = vld [vmem:[#allocation2 + $0x28] sm:$0xf]
        %v1682 = vld [vmem:[#allocation2 + $0x2c] sm:$0xf]
        %v1683 = vld [vmem:[#allocation2 + $0x30] sm:$0xf]
        %v1684 = vld [vmem:[#allocation2 + $0x34] sm:$0xf]
        %v1685 = vld [vmem:[#allocation2 + $0x38] sm:$0xf]
        %v1686 = vld [vmem:[#allocation2 + $0x3c] sm:$0xf]
        %v1687 = vld [vmem:[#allocation2 + $0x40] sm:$0xf]
        %v1688 = vld [vmem:[#allocation2 + $0x44] sm:$0xf]
        %v1689 = vld [vmem:[#allocation2 + $0x48] sm:$0xf]
        %v1690 = vld [vmem:[#allocation2 + $0x4c] sm:$0xf]
        %v1691 = vld [vmem:[#allocation2 + $0x50] sm:$0xf]
        %v1692 = vld [vmem:[#allocation2 + $0x54] sm:$0xf]
        %v1693 = vld [vmem:[#allocation2 + $0x58] sm:$0xf]
        %v1694 = vld [vmem:[#allocation2 + $0x5c] sm:$0xf]
        %v1695 = vld [vmem:[#allocation2 + $0x60] sm:$0xf]
        %v1696 = vld [vmem:[#allocation2 + $0x64] sm:$0xf]
        %v1697 = vld [vmem:[#allocation2 + $0x68] sm:$0xf]
        %v1698 = vld [vmem:[#allocation2 + $0x6c] sm:$0xf]
        %v1699 = vld [vmem:[#allocation2 + $0x70] sm:$0xf]
        %v1700 = vld [vmem:[#allocation2 + $0x74] sm:$0xf]
        %v1701 = vld [vmem:[#allocation2 + $0x78] sm:$0xf]
        %v1702 = vld [vmem:[#allocation2 + $0x7c] sm:$0xf]
        %v1703 = vld [vmem:[#allocation2 + $0x80] sm:$0xf]
        %v1704 = vld [vmem:[#allocation2 + $0x84] sm:$0xf]
        %v1705 = vld [vmem:[#allocation2 + $0x88] sm:$0xf]
        %v1706 = vld [vmem:[#allocation2 + $0x8c] sm:$0xf]
        %v1707 = vld [vmem:[#allocation2 + $0x90] sm:$0xf]
        %v1708 = vld [vmem:[#allocation2 + $0x94] sm:$0xf]
        %v1709 = vld [vmem:[#allocation2 + $0x98] sm:$0xf]
        %v1710 = vld [vmem:[#allocation2 + $0x9c] sm:$0xf]
        %v1711 = vld [vmem:[#allocation2 + $0xa0] sm:$0xf]
        %v1712 = vld [vmem:[#allocation2 + $0xa4] sm:$0xf]
        %v1713 = vld [vmem:[#allocation2 + $0xa8] sm:$0xf]
        %v1714 = vld [vmem:[#allocation2 + $0xac] sm:$0xf]
        %v1715 = vld [vmem:[#allocation2 + $0xb0] sm:$0xf]
        %v1716 = vld [vmem:[#allocation2 + $0xb4] sm:$0xf]
        %v1717 = vld [vmem:[#allocation2 + $0xb8] sm:$0xf]
        %v1718 = vld [vmem:[#allocation2 + $0xbc] sm:$0xf]
        %v1767 = vunpack.c.l.b16 %v1671
        %v1768 = vunpack.c.l.b16 %v1672
        %v1769 = vunpack.c.l.b16 %v1673
        %v1770 = vunpack.c.l.b16 %v1674
        %v1771 = vunpack.c.l.b16 %v1675
        %v1772 = vunpack.c.l.b16 %v1676
        %v1773 = vunpack.c.l.b16 %v1677
        %v1774 = vunpack.c.l.b16 %v1678
        %v1775 = vunpack.c.l.b16 %v1679
        %v1776 = vunpack.c.l.b16 %v1680
        %v1777 = vunpack.c.l.b16 %v1681
        %v1778 = vunpack.c.l.b16 %v1682
        %v1779 = vunpack.c.l.b16 %v1683
        %v1780 = vunpack.c.l.b16 %v1684
        %v1781 = vunpack.c.l.b16 %v1685
        %v1782 = vunpack.c.l.b16 %v1686
        %v1783 = vunpack.c.l.b16 %v1687
        %v1784 = vunpack.c.l.b16 %v1688
        %v1785 = vunpack.c.l.b16 %v1689
        %v1786 = vunpack.c.l.b16 %v1690
        %v1787 = vunpack.c.l.b16 %v1691
        %v1788 = vunpack.c.l.b16 %v1692
        %v1789 = vunpack.c.l.b16 %v1693
        %v1790 = vunpack.c.l.b16 %v1694
        %v1791 = vunpack.c.l.b16 %v1695
        %v1792 = vunpack.c.l.b16 %v1696
        %v1793 = vunpack.c.l.b16 %v1697
        %v1794 = vunpack.c.l.b16 %v1698
        %v1795 = vunpack.c.l.b16 %v1699
        %v1796 = vunpack.c.l.b16 %v1700
        %v1797 = vunpack.c.l.b16 %v1701
        %v1798 = vunpack.c.l.b16 %v1702
        %v1799 = vunpack.c.l.b16 %v1703
        %v1800 = vunpack.c.l.b16 %v1704
        %v1801 = vunpack.c.l.b16 %v1705
        %v1802 = vunpack.c.l.b16 %v1706
        %v1803 = vunpack.c.l.b16 %v1707
        %v1804 = vunpack.c.l.b16 %v1708
        %v1805 = vunpack.c.l.b16 %v1709
        %v1806 = vunpack.c.l.b16 %v1710
        %v1807 = vunpack.c.l.b16 %v1711
        %v1808 = vunpack.c.l.b16 %v1712
        %v1809 = vunpack.c.l.b16 %v1713
        %v1810 = vunpack.c.l.b16 %v1714
        %v1811 = vunpack.c.l.b16 %v1715
        %v1812 = vunpack.c.l.b16 %v1716
        %v1813 = vunpack.c.l.b16 %v1717
        %v1814 = vunpack.c.l.b16 %v1718
        %v1815 = vpack.c.b16 %v1768, %v1767
        %v1816 = vpack.c.b16 %v1770, %v1769
        %v1817 = vpack.c.b16 %v1772, %v1771
        %v1818 = vpack.c.b16 %v1774, %v1773
        %v1819 = vpack.c.b16 %v1776, %v1775
        %v1820 = vpack.c.b16 %v1778, %v1777
        %v1821 = vpack.c.b16 %v1780, %v1779
        %v1822 = vpack.c.b16 %v1782, %v1781
        %v1823 = vpack.c.b16 %v1784, %v1783
        %v1824 = vpack.c.b16 %v1786, %v1785
        %v1825 = vpack.c.b16 %v1788, %v1787
        %v1826 = vpack.c.b16 %v1790, %v1789
        %v1827 = vpack.c.b16 %v1792, %v1791
        %v1828 = vpack.c.b16 %v1794, %v1793
        %v1829 = vpack.c.b16 %v1796, %v1795
        %v1830 = vpack.c.b16 %v1798, %v1797
        %v1831 = vpack.c.b16 %v1800, %v1799
        %v1832 = vpack.c.b16 %v1802, %v1801
        %v1833 = vpack.c.b16 %v1804, %v1803
        %v1834 = vpack.c.b16 %v1806, %v1805
        %v1835 = vpack.c.b16 %v1808, %v1807
        %v1836 = vpack.c.b16 %v1810, %v1809
        %v1837 = vpack.c.b16 %v1812, %v1811
        %v1838 = vpack.c.b16 %v1814, %v1813
        %1863 = vmatprep.subr.bf16.mxu0 0
        %1864 = vmatpush1.bf16.msra.mxu0 %v1822
        %1865 = vmatprep.subr.bf16.mxu0 0
        %1866 = vmatpush1.bf16.msra.mxu0 %v1821
        %1867 = vmatprep.subr.bf16.mxu0 0
        %1868 = vmatpush1.bf16.msra.mxu0 %v1820
        %1869 = vmatprep.subr.bf16.mxu0 0
        %1870 = vmatpush1.bf16.msra.mxu0 %v1819
        %1871 = vmatprep.subr.bf16.mxu0 0
        %1872 = vmatpush1.bf16.msra.mxu0 %v1818
        %1873 = vmatprep.subr.bf16.mxu0 0
        %1874 = vmatpush1.bf16.msra.mxu0 %v1817
        %1875 = vmatprep.subr.bf16.mxu0 0
        %1876 = vmatpush1.bf16.msra.mxu0 %v1816
        %1877 = vmatprep.subr.bf16.mxu0 0
        %1878 = vmatpush1.bf16.msra.mxu0 %v1815
        %1879 = vmatprep.subr.bf16.mxu0 0
        %1880 = vmatpush2.bf16.msra.mxu0 %v1830
        %1881 = vmatprep.subr.bf16.mxu0 0
        %1882 = vmatpush2.bf16.msra.mxu0 %v1829
        %1883 = vmatprep.subr.bf16.mxu0 0
        %1884 = vmatpush2.bf16.msra.mxu0 %v1828
        %1885 = vmatprep.subr.bf16.mxu0 0
        %1886 = vmatpush2.bf16.msra.mxu0 %v1827
        %1887 = vmatprep.subr.bf16.mxu0 0
        %1888 = vmatpush2.bf16.msra.mxu0 %v1826
        %1889 = vmatprep.subr.bf16.mxu0 0
        %1890 = vmatpush2.bf16.msra.mxu0 %v1825
        %1891 = vmatprep.subr.bf16.mxu0 0
        %1892 = vmatpush2.bf16.msra.mxu0 %v1824
        %1893 = vmatprep.subr.bf16.mxu0 0
        %1894 = vmatpush2.bf16.msra.mxu0 %v1823
        %1895 = vmatprep.mubr.bf16.mxu0 %v1669
        %1896 = vmatmul.mubr.bf16.gmra.mxu0 %v1668
        %v1897 = vpop.f32.mrf.mxu0
        %v1898 = vadd.f32 0.0, %v1897
        %v1899 = vpop.f32.mrf.mxu0
        %v1900 = vpop.f32.mrf.mxu0
        %v1901 = vpop.f32.mrf.mxu0
        %1902 = vdwg.mxu0
        %1903 = vmatprep.subr.bf16.mxu0 0
        %1904 = vmatpush1.bf16.msra.mxu0 %v1838
        %1905 = vmatprep.subr.bf16.mxu0 0
        %1906 = vmatpush1.bf16.msra.mxu0 %v1837
        %1907 = vmatprep.subr.bf16.mxu0 0
        %1908 = vmatpush1.bf16.msra.mxu0 %v1836
        %1909 = vmatprep.subr.bf16.mxu0 0
        %1910 = vmatpush1.bf16.msra.mxu0 %v1835
        %1911 = vmatprep.subr.bf16.mxu0 0
        %1912 = vmatpush1.bf16.msra.mxu0 %v1834
        %1913 = vmatprep.subr.bf16.mxu0 0
        %1914 = vmatpush1.bf16.msra.mxu0 %v1833
        %1915 = vmatprep.subr.bf16.mxu0 0
        %1916 = vmatpush1.bf16.msra.mxu0 %v1832
        %1917 = vmatprep.subr.bf16.mxu0 0
        %1918 = vmatpush1.bf16.msra.mxu0 %v1831
        %1919 = vmatprep.subr.bf16.mxu0 0
        %1920 = vmatpush2.bf16.msra.mxu0 0
        %1921 = vmatprep.subr.bf16.mxu0 0
        %1922 = vmatpush2.bf16.msra.mxu0 0
        %1923 = vmatprep.subr.bf16.mxu0 0
        %1924 = vmatpush2.bf16.msra.mxu0 0
        %1925 = vmatprep.subr.bf16.mxu0 0
        %1926 = vmatpush2.bf16.msra.mxu0 0
        %1927 = vmatprep.subr.bf16.mxu0 0
        %1928 = vmatpush2.bf16.msra.mxu0 0
        %1929 = vmatprep.subr.bf16.mxu0 0
        %1930 = vmatpush2.bf16.msra.mxu0 0
        %1931 = vmatprep.subr.bf16.mxu0 0
        %1932 = vmatpush2.bf16.msra.mxu0 0
        %1933 = vmatprep.subr.bf16.mxu0 0
        %1934 = vmatpush2.bf16.msra.mxu0 0
        %1935 = vmatprep.mubr.bf16.mxu0 0
        %1936 = vmatmul.mubr.bf16.gmra.mxu0 %v1670
        %v1937 = vpop.f32.mrf.mxu0
        %v1938 = vadd.f32 %v1898, %v1937
        %v1939 = vpop.f32.mrf.mxu0
        %v1940 = vpop.f32.mrf.mxu0
        %v1941 = vpop.f32.mrf.mxu0
        %1942 = vdwg.mxu0
        %v1943 = vadd.f32 %v1216, %v1938
        %1944 = vst [vmem:[%s351] sm:$0xff] %v1943
        %s1945 = sand.u32 %s227, 1
        %s1946 = scalar_lea.sflag [#allocation4], %s1945
        %s1947 = sand.u32 %s227, 1
        %s1948 = smul.addr %s1947, 8
        %s1949 = scalar_lea.vmem [#allocation7], %s1948
        // Predicated region
        $region65: #{transformer_block_pallas.1} parent=55 // pred_check
          %p1950 = pneg %p237
        $region66: #{transformer_block_pallas.1} parent=55 // pred_check_branch
          %1952 = sbr.rel (%p1950) target = $region68
        $region67: #{transformer_block_pallas.1} parent=55 // pred_region
          %s1954 = ssub.s32 128, 128
          %1955 = vsyncadd %s1946, %s1954
          %s1956 = smul.addr %s25, 128
          %s1957 = scalar_lea.hbm %s9, %s1956
          %s1959 = sshll.u32 %s1949, 4
          %s1960 = int_to_ptr.vmem [resolvable:$true] %s1959
          %1962 = dma.vmem_to_hbm [thread:$0]  %s1960, 128, %s1957, %s1946
        $region68: #{transformer_block_pallas.1} parent=55 // pred_fallthru
          _
      $region56: #{transformer_block_pallas.1} parent=5 // pred_fallthru
        _
      %p1963 = scmp.le.s32.totalorder 2, %s20
      // Predicated region
      $region69: #{transformer_block_pallas.1} parent=5 // pred_check
        %p1964 = pneg %p1963
      $region70: #{transformer_block_pallas.1} parent=5 // pred_check_branch
        %1966 = sbr.rel (%p1964) target = $region72
      $region71: #{transformer_block_pallas.1} parent=5 // pred_region
        %s1967 = ssub.s32 %s20, 2
        // Predicated region
        $region73: #{transformer_block_pallas.1} parent=71 // pred_check
          %p1968 = pneg %p243
        $region74: #{transformer_block_pallas.1} parent=71 // pred_check_branch
          %1970 = sbr.rel (%p1968) target = $region76
        $region75: #{transformer_block_pallas.1} parent=71 // pred_region
          %s1971 = sand.u32 %s228, 1
          %s1972 = scalar_lea.sflag [#allocation4], %s1971
          %s1973 = sand.u32 %s228, 1
          %s1974 = smul.addr %s1973, 8
          %s1975 = scalar_lea.vmem [#allocation7], %s1974
          %1976 = dma.done %s1972, 128
        $region76: #{transformer_block_pallas.1} parent=71 // pred_fallthru
          _
      $region72: #{transformer_block_pallas.1} parent=5 // pred_fallthru
        _
    $region6: #{transformer_block_pallas.1} parent=1 // loop_footer
      %s24 = sadd.s32 1, %s20
    $region7: #{transformer_block_pallas.1} parent=1 // loop_footer_branch
      %19 = sbr.rel target = $region3
    $region8: #{transformer_block_pallas.1} parent=1 // loop_exit
      _
    %1977 = vsyncpa [#allocation3], 1
    %s1978 = scalar_lea.sflag [#allocation3], 1
    %1979 = vsyncpa %s1978, 1
    %1980 = vsyncpa [#allocation6], 1
    %1981 = vsyncpa [#allocation4], 1
    %s1982 = scalar_lea.sflag [#allocation4], 1
    %1983 = vsyncpa %s1982, 1

</llo_original>
